<compile_context>
chip_gen: v7x
topology: tpu7x:2x2x1
jax: 0.10.0
libtpu: 0.0.40
codegen_flags: <defaults>
</compile_context>

<pallas_src>
import jax
import jax.numpy as jnp
from jax.experimental import pallas as pl
from jax.experimental.pallas import tpu as pltpu

IN_FEATURES = 32 * 32 * 3   # 3072
HIDDEN = 256
TM_MAX = 512                # batch tile cap (fits v5e/v7x VMEM with f32 x)


def mlp_kernel(x_ref, w1_ref, b1_ref, w2_ref, b2_ref, o_ref):
    # fused: relu(relu(x @ W1 + b1) @ W2 + b2)
    x = x_ref[...].astype(jnp.bfloat16)              # f32 HBM read, free VPU cast
    h = jnp.dot(x, w1_ref[...],
                preferred_element_type=jnp.float32) + b1_ref[...]
    h = jnp.maximum(h, 0.0)
    o = jnp.dot(h.astype(jnp.bfloat16), w2_ref[...],
                preferred_element_type=jnp.float32) + b2_ref[...]
    o_ref[...] = jnp.maximum(o, 0.0).astype(o_ref.dtype)


def _round_up(x, m):
    return -(-x // m) * m


def mlp_forward(img, w1_bf16, b1_2d, w2_bf16, b2_2d):
    """img: (N, 3, 32, 32) f32; weights already bf16; biases (1, 256) f32.

    Returns (f_add, f_cat), both (N, 256) f32.
    """
    n = img.shape[0]
    flat = img.reshape(n, IN_FEATURES)                # same row ordering as torch .view

    # Batch tile: multiple of 8 sublanes; aim for >= 2 grid steps (megacore on
    # v7x) while capping the tile so the double-buffered f32 x block fits VMEM.
    tm = min(TM_MAX, max(8, _round_up(-(-n // 2), 8)))
    grid = (pl.cdiv(n, tm),)

    flops = 2 * n * (IN_FEATURES * HIDDEN + HIDDEN * HIDDEN)
    bytes_accessed = (4 * n * IN_FEATURES                      # x read (f32)
                      + 4 * n * HIDDEN                          # out write (f32)
                      + 2 * (IN_FEATURES * HIDDEN + HIDDEN * HIDDEN)  # bf16 weights
                      + 2 * 4 * HIDDEN)                         # biases

    f3 = pl.pallas_call(
        mlp_kernel,
        out_shape=jax.ShapeDtypeStruct((n, HIDDEN), jnp.float32),
        grid_spec=pltpu.PrefetchScalarGridSpec(
            num_scalar_prefetch=0,
            grid=grid,
            in_specs=[
                pl.BlockSpec((tm, IN_FEATURES), lambda i: (i, 0)),
                # Constant-index operands: single-buffered, VMEM-resident.
                pl.BlockSpec((IN_FEATURES, HIDDEN), lambda i: (0, 0),
                             pipeline_mode=pl.Buffered(1)),
                pl.BlockSpec((1, HIDDEN), lambda i: (0, 0),
                             pipeline_mode=pl.Buffered(1)),
                pl.BlockSpec((HIDDEN, HIDDEN), lambda i: (0, 0),
                             pipeline_mode=pl.Buffered(1)),
                pl.BlockSpec((1, HIDDEN), lambda i: (0, 0),
                             pipeline_mode=pl.Buffered(1)),
            ],
            out_specs=pl.BlockSpec((tm, HIDDEN), lambda i: (i, 0)),
        ),
        compiler_params=pltpu.CompilerParams(
            dimension_semantics=("parallel",),      # megacore batch split
            vmem_limit_bytes=32 << 20),             # explicit headroom (v5e default is 16 MiB)
        cost_estimate=pl.CostEstimate(flops=flops, transcendentals=0,
                                      bytes_accessed=bytes_accessed),
    )(flat, w1_bf16, b1_2d, w2_bf16, b2_2d)

    # torch.cat([f3], dim=1) of a single tensor is the identity; return the
    # same array twice (no extra HBM copy).
    return f3, f3


def init_params(key):
    # Deterministic init mimicking nn.Linear's uniform(-1/sqrt(fan_in), ...)
    k1, k2, k3, k4 = jax.random.split(key, 4)
    bound1 = 1.0 / jnp.sqrt(IN_FEATURES)
    bound2 = 1.0 / jnp.sqrt(HIDDEN)
    w1 = jax.random.uniform(k1, (IN_FEATURES, HIDDEN), jnp.float32, -bound1, bound1)
    b1 = jax.random.uniform(k2, (HIDDEN,), jnp.float32, -bound1, bound1)
    w2 = jax.random.uniform(k3, (HIDDEN, HIDDEN), jnp.float32, -bound2, bound2)
    b2 = jax.random.uniform(k4, (HIDDEN,), jnp.float32, -bound2, bound2)
    return w1, b1, w2, b2


if __name__ == "__main__":
    key = jax.random.PRNGKey(0)
    kp, kx = jax.random.split(key)
    w1, b1, w2, b2 = init_params(kp)

    # Hoisted, one-time parameter prep (outside the jitted per-call path).
    w1_bf16 = jax.device_put(w1.astype(jnp.bfloat16))
    w2_bf16 = jax.device_put(w2.astype(jnp.bfloat16))
    b1_2d = b1.reshape(1, HIDDEN).astype(jnp.float32)
    b2_2d = b2.reshape(1, HIDDEN).astype(jnp.float32)

    # Small batch consistent with the module (original uses N=1; use N=2).
    img = jax.random.normal(kx, (2, 3, 32, 32), dtype=jnp.float32)

    f_add, f_cat = jax.jit(mlp_forward)(img, w1_bf16, b1_2d, w2_bf16, b2_2d)
    jax.block_until_ready((f_add, f_cat))

    # bf16-aware reference in plain JAX (same operand precision, f32 accumulate).
    flat = img.reshape(img.shape[0], IN_FEATURES)
    h_ref = jnp.maximum(
        jnp.dot(flat.astype(jnp.bfloat16), w1.astype(jnp.bfloat16),
                preferred_element_type=jnp.float32) + b1, 0.0)
    ref = jnp.maximum(
        jnp.dot(h_ref.astype(jnp.bfloat16), w2.astype(jnp.bfloat16),
                preferred_element_type=jnp.float32) + b2, 0.0)
    # Full-f32 reference for a coarse sanity bound.
    ref_f32 = jnp.maximum(jnp.maximum(flat @ w1 + b1, 0.0) @ w2 + b2, 0.0)

    assert f_add.shape == (2, HIDDEN) and f_cat.shape == (2, HIDDEN)
    assert jnp.allclose(f_add, ref, atol=1e-2, rtol=1e-2)
    assert jnp.allclose(f_cat, ref, atol=1e-2, rtol=1e-2)
    assert jnp.allclose(f_add, ref_f32, atol=5e-2, rtol=5e-2)

    print("KERNEL_OK")
</pallas_src>

<mosaic_0001>
module attributes {stable_mosaic.version = 11 : i64} {
  func.func @mlp_kernel(%arg0: i32, %arg1: memref<8x3072xf32, #tpu.memory_space<vmem>>, %arg2: memref<3072x256xbf16, #tpu.memory_space<vmem>>, %arg3: memref<1x256xf32, #tpu.memory_space<vmem>>, %arg4: memref<256x256xbf16, #tpu.memory_space<vmem>>, %arg5: memref<1x256xf32, #tpu.memory_space<vmem>>, %arg6: memref<8x256xf32, #tpu.memory_space<vmem>>) attributes {dimension_semantics = [#tpu.dimension_semantics<parallel>], iteration_bounds = array<i64: 1>, scalar_prefetch = 0 : i64, scratch_operands = 0 : i64, tpu.core_type = #tpu.core_type<tc>, window_params = [{transform_indices = @transform_0, window_bounds = array<i64: 8, 3072>}, {pipeline_mode = #tpu.pipeline_mode<synchronous>, transform_indices = @transform_1, window_bounds = array<i64: 3072, 256>}, {pipeline_mode = #tpu.pipeline_mode<synchronous>, transform_indices = @transform_2, window_bounds = array<i64: 1, 256>}, {pipeline_mode = #tpu.pipeline_mode<synchronous>, transform_indices = @transform_3, window_bounds = array<i64: 256, 256>}, {pipeline_mode = #tpu.pipeline_mode<synchronous>, transform_indices = @transform_4, window_bounds = array<i64: 1, 256>}, {transform_indices = @transform_5, window_bounds = array<i64: 8, 256>}]} {
    %c0 = arith.constant 0 : index
    %c0_0 = arith.constant 0 : index
    %0 = vector.load %arg1[%c0, %c0_0] : memref<8x3072xf32, #tpu.memory_space<vmem>>, vector<8x3072xf32>
    %1 = arith.truncf %0 : vector<8x3072xf32> to vector<8x3072xbf16>
    %c0_1 = arith.constant 0 : index
    %c0_2 = arith.constant 0 : index
    %2 = vector.load %arg2[%c0_1, %c0_2] : memref<3072x256xbf16, #tpu.memory_space<vmem>>, vector<3072x256xbf16>
    %cst = arith.constant dense<0.000000e+00> : vector<8x256xf32>
    %3 = tpu.matmul %1, %2, %cst {dimension_numbers = #tpu.dot_dimension_numbers<[1], [0], [0], [1], [0, 0, 1, 1], [], []>} : vector<8x3072xbf16>, vector<3072x256xbf16>, vector<8x256xf32> -> vector<8x256xf32>
    %c0_3 = arith.constant 0 : index
    %c0_4 = arith.constant 0 : index
    %4 = vector.load %arg3[%c0_3, %c0_4] : memref<1x256xf32, #tpu.memory_space<vmem>>, vector<1x256xf32>
    %5 = vector.broadcast %4 : vector<1x256xf32> to vector<8x256xf32>
    %6 = arith.addf %3, %5 : vector<8x256xf32>
    %cst_5 = arith.constant 0.000000e+00 : f32
    %7 = vector.broadcast %cst_5 : f32 to vector<8x256xf32>
    %8 = arith.maximumf %6, %7 : vector<8x256xf32>
    %9 = arith.truncf %8 : vector<8x256xf32> to vector<8x256xbf16>
    %c0_6 = arith.constant 0 : index
    %c0_7 = arith.constant 0 : index
    %10 = vector.load %arg4[%c0_6, %c0_7] : memref<256x256xbf16, #tpu.memory_space<vmem>>, vector<256x256xbf16>
    %cst_8 = arith.constant dense<0.000000e+00> : vector<8x256xf32>
    %11 = tpu.matmul %9, %10, %cst_8 {dimension_numbers = #tpu.dot_dimension_numbers<[1], [0], [0], [1], [0, 0, 1, 1], [], []>} : vector<8x256xbf16>, vector<256x256xbf16>, vector<8x256xf32> -> vector<8x256xf32>
    %c0_9 = arith.constant 0 : index
    %c0_10 = arith.constant 0 : index
    %12 = vector.load %arg5[%c0_9, %c0_10] : memref<1x256xf32, #tpu.memory_space<vmem>>, vector<1x256xf32>
    %13 = vector.broadcast %12 : vector<1x256xf32> to vector<8x256xf32>
    %14 = arith.addf %11, %13 : vector<8x256xf32>
    %cst_11 = arith.constant 0.000000e+00 : f32
    %15 = vector.broadcast %cst_11 : f32 to vector<8x256xf32>
    %16 = arith.maximumf %14, %15 : vector<8x256xf32>
    %c0_12 = arith.constant 0 : index
    %c0_13 = arith.constant 0 : index
    %17 = vector.load %arg6[%c0_12, %c0_13] : memref<8x256xf32, #tpu.memory_space<vmem>>, vector<8x256xf32>
    tpu.vector_store %arg6[%c0_12, %c0_13], %16 {strides = array<i32>} : memref<8x256xf32, #tpu.memory_space<vmem>>, vector<8x256xf32>,
    return
  }
  func.func @transform_0(%arg0: i32) -> (i32, i32) {
    %c0_i32 = arith.constant 0 : i32
    %c0_i32_0 = arith.constant 0 : i32
    return %arg0, %c0_i32 : i32, i32
  }
  func.func @transform_1(%arg0: i32) -> (i32, i32) {
    %c0_i32 = arith.constant 0 : i32
    %c0_i32_0 = arith.constant 0 : i32
    %c0_i32_1 = arith.constant 0 : i32
    return %c0_i32, %c0_i32_0 : i32, i32
  }
  func.func @transform_2(%arg0: i32) -> (i32, i32) {
    %c0_i32 = arith.constant 0 : i32
    %c0_i32_0 = arith.constant 0 : i32
    %c0_i32_1 = arith.constant 0 : i32
    return %c0_i32, %c0_i32_0 : i32, i32
  }
  func.func @transform_3(%arg0: i32) -> (i32, i32) {
    %c0_i32 = arith.constant 0 : i32
    %c0_i32_0 = arith.constant 0 : i32
    %c0_i32_1 = arith.constant 0 : i32
    return %c0_i32, %c0_i32_0 : i32, i32
  }
  func.func @transform_4(%arg0: i32) -> (i32, i32) {
    %c0_i32 = arith.constant 0 : i32
    %c0_i32_0 = arith.constant 0 : i32
    %c0_i32_1 = arith.constant 0 : i32
    return %c0_i32, %c0_i32_0 : i32, i32
  }
  func.func @transform_5(%arg0: i32) -> (i32, i32) {
    %c0_i32 = arith.constant 0 : i32
    %c0_i32_0 = arith.constant 0 : i32
    return %arg0, %c0_i32 : i32, i32
  }
}

</mosaic_0001>

<llo_original>
// kernel: mlp_forward.1
$region0: #{mlp_forward.1}
  #allocation0 [shape = 'u32[]', space=smem, size = 0x4, offset = 0x4, fixed_abs, tag = 'smem constant byte address 0x4 - core index']
  #allocation1 [shape = 'u32[144,128]{1,0:T(1,128)}', space=vmem, size = 0x12000, scoped, tag = 'internal scratch']
  %s0 = inlined_call_operand.vmem [shape: f32[2,3072], index: 0, kind: input, shape index: {}]
  %s1 = inlined_call_operand.hbm [shape: bf16[3072,256], index: 1, kind: input, shape index: {}]
  %s2 = inlined_call_operand.hbm [shape: f32[1,256], index: 2, kind: input, shape index: {}]
  %s3 = inlined_call_operand.hbm [shape: bf16[256,256], index: 3, kind: input, shape index: {}]
  %s4 = inlined_call_operand.hbm [shape: f32[1,256], index: 4, kind: input, shape index: {}]
  %s5 = inlined_call_operand.vmem [shape: f32[2,256], index: 5, kind: output, shape index: {}]
  %s6 = sld [smem:[#allocation0]]
  $region76: #{mlp_forward.1} parent=0
    _
  %s8 = ssub.s32 1, %s6
  %s9 = scalar_select 0, %s8, %s6
  $region1: #{mlp_forward.1} parent=0
    #allocation2 [shape = 'u8[1572864]{0}', space=vmem, size = 0x180000, scoped, tag = 'input window, operand 1, single buffered']
    #allocation3 [shape = 's32[1]{0}', space=sflag, size = 0x4, scoped, tag = 'scoped memory for mlp_forward.1']
    #allocation4 [shape = 'u8[1024]{0}', space=vmem, size = 0x400, scoped, tag = 'input window, operand 2, single buffered']
    #allocation5 [shape = 's32[1]{0}', space=sflag, size = 0x4, scoped, tag = 'scoped memory for mlp_forward.1']
    #allocation6 [shape = 'u8[131072]{0}', space=vmem, size = 0x20000, scoped, tag = 'input window, operand 3, single buffered']
    #allocation7 [shape = 'u8[1024]{0}', space=vmem, size = 0x400, scoped, tag = 'input window, operand 4, single buffered']
    #allocation8 [shape = 's32[1]{0}', space=sflag, size = 0x4, scoped, tag = 'scoped memory for mlp_forward.1']
    #allocation9 [shape = 'u8[8192]{0}', space=vmem, size = 0x2000, scoped, tag = 'output window, operand 0, single buffered']
    %10 = vsyncpa [#allocation3], 0
    %11 = vsyncpa [#allocation5], 0
    %12 = vsyncpa [#allocation8], 0
    // Predicated region
    $region2: #{mlp_forward.1} parent=1 // pred_check
      _
    $region3: #{mlp_forward.1} parent=1 // pred_check_branch
      %14 = sbr.rel (0) target = $region5
    $region4: #{mlp_forward.1} parent=1 // pred_region
      _
    $region5: #{mlp_forward.1} parent=1 // pred_fallthru
      _
    // Predicated region
    $region6: #{mlp_forward.1} parent=1 // pred_check
      _
    $region7: #{mlp_forward.1} parent=1 // pred_check_branch
      %16 = sbr.rel (0) target = $region9
    $region8: #{mlp_forward.1} parent=1 // pred_region
      %s18 = ssub.s32 49152, 49152
      %19 = vsyncadd [#allocation3], %s18
      %s20 = sshll.u32 [#allocation2], 4
      %s21 = int_to_ptr.vmem [resolvable:$true] %s20
      %26 = dma.hbm_to_vmem [thread:$0]  %s1, 49152, %s21, [#allocation3], 128, 128, 8
    $region9: #{mlp_forward.1} parent=1 // pred_fallthru
      _
    // Predicated region
    $region10: #{mlp_forward.1} parent=1 // pred_check
      _
    $region11: #{mlp_forward.1} parent=1 // pred_check_branch
      %28 = sbr.rel (0) target = $region13
    $region12: #{mlp_forward.1} parent=1 // pred_region
      %s30 = ssub.s32 32, 32
      %31 = vsyncadd [#allocation5], %s30
      %s33 = sshll.u32 [#allocation4], 4
      %s34 = int_to_ptr.vmem [resolvable:$true] %s33
      %36 = dma.hbm_to_vmem [thread:$0]  %s2, 32, %s34, [#allocation5]
    $region13: #{mlp_forward.1} parent=1 // pred_fallthru
      _
    // Predicated region
    $region14: #{mlp_forward.1} parent=1 // pred_check
      _
    $region15: #{mlp_forward.1} parent=1 // pred_check_branch
      %38 = sbr.rel (0) target = $region17
    $region16: #{mlp_forward.1} parent=1 // pred_region
      %s40 = ssub.s32 4096, 4096
      %41 = vsyncadd [#allocation5], %s40
      %s42 = sshll.u32 [#allocation6], 4
      %s43 = int_to_ptr.vmem [resolvable:$true] %s42
      %48 = dma.hbm_to_vmem [thread:$0]  %s3, 4096, %s43, [#allocation5], 128, 128, 8
    $region17: #{mlp_forward.1} parent=1 // pred_fallthru
      _
    // Predicated region
    $region18: #{mlp_forward.1} parent=1 // pred_check
      _
    $region19: #{mlp_forward.1} parent=1 // pred_check_branch
      %50 = sbr.rel (0) target = $region21
    $region20: #{mlp_forward.1} parent=1 // pred_region
      %s52 = ssub.s32 32, 32
      %53 = vsyncadd [#allocation8], %s52
      %s55 = sshll.u32 [#allocation7], 4
      %s56 = int_to_ptr.vmem [resolvable:$true] %s55
      %58 = dma.hbm_to_vmem [thread:$0]  %s4, 32, %s56, [#allocation8]
    $region21: #{mlp_forward.1} parent=1 // pred_fallthru
      _
    // Predicated region
    $region22: #{mlp_forward.1} parent=1 // pred_check
      _
    $region23: #{mlp_forward.1} parent=1 // pred_check_branch
      %60 = sbr.rel (0) target = $region25
    $region24: #{mlp_forward.1} parent=1 // pred_region
      %61 = dma.done [#allocation3], 49152
    $region25: #{mlp_forward.1} parent=1 // pred_fallthru
      _
    // Predicated region
    $region26: #{mlp_forward.1} parent=1 // pred_check
      _
    $region27: #{mlp_forward.1} parent=1 // pred_check_branch
      %63 = sbr.rel (0) target = $region29
    $region28: #{mlp_forward.1} parent=1 // pred_region
      %64 = dma.done [#allocation5], 32
    $region29: #{mlp_forward.1} parent=1 // pred_fallthru
      _
    // Predicated region
    $region30: #{mlp_forward.1} parent=1 // pred_check
      _
    $region31: #{mlp_forward.1} parent=1 // pred_check_branch
      %66 = sbr.rel (0) target = $region33
    $region32: #{mlp_forward.1} parent=1 // pred_region
      %67 = dma.done [#allocation5], 4096
    $region33: #{mlp_forward.1} parent=1 // pred_fallthru
      _
    // Predicated region
    $region34: #{mlp_forward.1} parent=1 // pred_check
      _
    $region35: #{mlp_forward.1} parent=1 // pred_check_branch
      %69 = sbr.rel (0) target = $region37
    $region36: #{mlp_forward.1} parent=1 // pred_region
      %70 = dma.done [#allocation8], 32
    $region37: #{mlp_forward.1} parent=1 // pred_fallthru
      _
    %v71 = vld [vmem:[%s0] sm:$0xff]
    %v72 = vld [vmem:[%s0 + $0x8] sm:$0xff]
    %v73 = vld [vmem:[%s0 + $0x10] sm:$0xff]
    %v74 = vld [vmem:[%s0 + $0x18] sm:$0xff]
    %v75 = vld [vmem:[%s0 + $0x20] sm:$0xff]
    %v76 = vld [vmem:[%s0 + $0x28] sm:$0xff]
    %v77 = vld [vmem:[%s0 + $0x30] sm:$0xff]
    %v78 = vld [vmem:[%s0 + $0x38] sm:$0xff]
    %v79 = vld [vmem:[%s0 + $0x40] sm:$0xff]
    %v80 = vld [vmem:[%s0 + $0x48] sm:$0xff]
    %v81 = vld [vmem:[%s0 + $0x50] sm:$0xff]
    %v82 = vld [vmem:[%s0 + $0x58] sm:$0xff]
    %v83 = vld [vmem:[%s0 + $0x60] sm:$0xff]
    %v84 = vld [vmem:[%s0 + $0x68] sm:$0xff]
    %v85 = vld [vmem:[%s0 + $0x70] sm:$0xff]
    %v86 = vld [vmem:[%s0 + $0x78] sm:$0xff]
    %v87 = vld [vmem:[%s0 + $0x80] sm:$0xff]
    %v88 = vld [vmem:[%s0 + $0x88] sm:$0xff]
    %v89 = vld [vmem:[%s0 + $0x90] sm:$0xff]
    %v90 = vld [vmem:[%s0 + $0x98] sm:$0xff]
    %v91 = vld [vmem:[%s0 + $0xa0] sm:$0xff]
    %v92 = vld [vmem:[%s0 + $0xa8] sm:$0xff]
    %v93 = vld [vmem:[%s0 + $0xb0] sm:$0xff]
    %v94 = vld [vmem:[%s0 + $0xb8] sm:$0xff]
    %v119 = vcombine.low %v71, %v77
    %v120 = vcombine.high %v71, %v77
    %v121 = vcombine.low %v83, %v89
    %v122 = vcombine.high %v83, %v89
    %v124 = vunpack.c.l.s4 1983009808
    %v125 = vunpack.c.0.s8 %v124
    %v126 = vlaneseq
    %v127 = vshrl.u32 %v126, 7
    %v128 = vsub.s32 %v125, %v127
    %v129 = vrot.slane %v119, %v128
    %v131 = vunpack.c.l.s4 1983009808
    %v132 = vunpack.c.0.s8 %v131
    %v133 = vlaneseq
    %v134 = vshrl.u32 %v133, 7
    %v135 = vsub.s32 %v132, %v134
    %v136 = vrot.slane %v120, %v135
    %v138 = vunpack.c.l.s4 1983009808
    %v139 = vunpack.c.0.s8 %v138
    %v140 = vlaneseq
    %v141 = vshrl.u32 %v140, 7
    %v142 = vsub.s32 %v139, %v141
    %v143 = vrot.slane %v121, %v142
    %v145 = vunpack.c.l.s4 1983009808
    %v146 = vunpack.c.0.s8 %v145
    %v147 = vlaneseq
    %v148 = vshrl.u32 %v147, 7
    %v149 = vsub.s32 %v146, %v148
    %v150 = vrot.slane %v122, %v149
    %v151 = vcombine.low %v129, %v143
    %v152 = vcombine.high %v129, %v143
    %v153 = vcombine.low %v136, %v150
    %v154 = vcombine.high %v136, %v150
    %v155 = vcombine.low %v72, %v78
    %v156 = vcombine.high %v72, %v78
    %v157 = vcombine.low %v84, %v90
    %v158 = vcombine.high %v84, %v90
    %v160 = vunpack.c.l.s4 1983009808
    %v161 = vunpack.c.0.s8 %v160
    %v162 = vlaneseq
    %v163 = vshrl.u32 %v162, 7
    %v164 = vsub.s32 %v161, %v163
    %v165 = vrot.slane %v155, %v164
    %v167 = vunpack.c.l.s4 1983009808
    %v168 = vunpack.c.0.s8 %v167
    %v169 = vlaneseq
    %v170 = vshrl.u32 %v169, 7
    %v171 = vsub.s32 %v168, %v170
    %v172 = vrot.slane %v156, %v171
    %v174 = vunpack.c.l.s4 1983009808
    %v175 = vunpack.c.0.s8 %v174
    %v176 = vlaneseq
    %v177 = vshrl.u32 %v176, 7
    %v178 = vsub.s32 %v175, %v177
    %v179 = vrot.slane %v157, %v178
    %v181 = vunpack.c.l.s4 1983009808
    %v182 = vunpack.c.0.s8 %v181
    %v183 = vlaneseq
    %v184 = vshrl.u32 %v183, 7
    %v185 = vsub.s32 %v182, %v184
    %v186 = vrot.slane %v158, %v185
    %v187 = vcombine.low %v165, %v179
    %v188 = vcombine.high %v165, %v179
    %v189 = vcombine.low %v172, %v186
    %v190 = vcombine.high %v172, %v186
    %v191 = vcombine.low %v73, %v79
    %v192 = vcombine.high %v73, %v79
    %v193 = vcombine.low %v85, %v91
    %v194 = vcombine.high %v85, %v91
    %v196 = vunpack.c.l.s4 1983009808
    %v197 = vunpack.c.0.s8 %v196
    %v198 = vlaneseq
    %v199 = vshrl.u32 %v198, 7
    %v200 = vsub.s32 %v197, %v199
    %v201 = vrot.slane %v191, %v200
    %v203 = vunpack.c.l.s4 1983009808
    %v204 = vunpack.c.0.s8 %v203
    %v205 = vlaneseq
    %v206 = vshrl.u32 %v205, 7
    %v207 = vsub.s32 %v204, %v206
    %v208 = vrot.slane %v192, %v207
    %v210 = vunpack.c.l.s4 1983009808
    %v211 = vunpack.c.0.s8 %v210
    %v212 = vlaneseq
    %v213 = vshrl.u32 %v212, 7
    %v214 = vsub.s32 %v211, %v213
    %v215 = vrot.slane %v193, %v214
    %v217 = vunpack.c.l.s4 1983009808
    %v218 = vunpack.c.0.s8 %v217
    %v219 = vlaneseq
    %v220 = vshrl.u32 %v219, 7
    %v221 = vsub.s32 %v218, %v220
    %v222 = vrot.slane %v194, %v221
    %v223 = vcombine.low %v201, %v215
    %v224 = vcombine.high %v201, %v215
    %v225 = vcombine.low %v208, %v222
    %v226 = vcombine.high %v208, %v222
    %v227 = vcombine.low %v74, %v80
    %v228 = vcombine.high %v74, %v80
    %v229 = vcombine.low %v86, %v92
    %v230 = vcombine.high %v86, %v92
    %v232 = vunpack.c.l.s4 1983009808
    %v233 = vunpack.c.0.s8 %v232
    %v234 = vlaneseq
    %v235 = vshrl.u32 %v234, 7
    %v236 = vsub.s32 %v233, %v235
    %v237 = vrot.slane %v227, %v236
    %v239 = vunpack.c.l.s4 1983009808
    %v240 = vunpack.c.0.s8 %v239
    %v241 = vlaneseq
    %v242 = vshrl.u32 %v241, 7
    %v243 = vsub.s32 %v240, %v242
    %v244 = vrot.slane %v228, %v243
    %v246 = vunpack.c.l.s4 1983009808
    %v247 = vunpack.c.0.s8 %v246
    %v248 = vlaneseq
    %v249 = vshrl.u32 %v248, 7
    %v250 = vsub.s32 %v247, %v249
    %v251 = vrot.slane %v229, %v250
    %v253 = vunpack.c.l.s4 1983009808
    %v254 = vunpack.c.0.s8 %v253
    %v255 = vlaneseq
    %v256 = vshrl.u32 %v255, 7
    %v257 = vsub.s32 %v254, %v256
    %v258 = vrot.slane %v230, %v257
    %v259 = vcombine.low %v237, %v251
    %v260 = vcombine.high %v237, %v251
    %v261 = vcombine.low %v244, %v258
    %v262 = vcombine.high %v244, %v258
    %v263 = vcombine.low %v75, %v81
    %v264 = vcombine.high %v75, %v81
    %v265 = vcombine.low %v87, %v93
    %v266 = vcombine.high %v87, %v93
    %v268 = vunpack.c.l.s4 1983009808
    %v269 = vunpack.c.0.s8 %v268
    %v270 = vlaneseq
    %v271 = vshrl.u32 %v270, 7
    %v272 = vsub.s32 %v269, %v271
    %v273 = vrot.slane %v263, %v272
    %v275 = vunpack.c.l.s4 1983009808
    %v276 = vunpack.c.0.s8 %v275
    %v277 = vlaneseq
    %v278 = vshrl.u32 %v277, 7
    %v279 = vsub.s32 %v276, %v278
    %v280 = vrot.slane %v264, %v279
    %v282 = vunpack.c.l.s4 1983009808
    %v283 = vunpack.c.0.s8 %v282
    %v284 = vlaneseq
    %v285 = vshrl.u32 %v284, 7
    %v286 = vsub.s32 %v283, %v285
    %v287 = vrot.slane %v265, %v286
    %v289 = vunpack.c.l.s4 1983009808
    %v290 = vunpack.c.0.s8 %v289
    %v291 = vlaneseq
    %v292 = vshrl.u32 %v291, 7
    %v293 = vsub.s32 %v290, %v292
    %v294 = vrot.slane %v266, %v293
    %v295 = vcombine.low %v273, %v287
    %v296 = vcombine.high %v273, %v287
    %v297 = vcombine.low %v280, %v294
    %v298 = vcombine.high %v280, %v294
    %v299 = vcombine.low %v76, %v82
    %v300 = vcombine.high %v76, %v82
    %v301 = vcombine.low %v88, %v94
    %v302 = vcombine.high %v88, %v94
    %v304 = vunpack.c.l.s4 1983009808
    %v305 = vunpack.c.0.s8 %v304
    %v306 = vlaneseq
    %v307 = vshrl.u32 %v306, 7
    %v308 = vsub.s32 %v305, %v307
    %v309 = vrot.slane %v299, %v308
    %v311 = vunpack.c.l.s4 1983009808
    %v312 = vunpack.c.0.s8 %v311
    %v313 = vlaneseq
    %v314 = vshrl.u32 %v313, 7
    %v315 = vsub.s32 %v312, %v314
    %v316 = vrot.slane %v300, %v315
    %v318 = vunpack.c.l.s4 1983009808
    %v319 = vunpack.c.0.s8 %v318
    %v320 = vlaneseq
    %v321 = vshrl.u32 %v320, 7
    %v322 = vsub.s32 %v319, %v321
    %v323 = vrot.slane %v301, %v322
    %v325 = vunpack.c.l.s4 1983009808
    %v326 = vunpack.c.0.s8 %v325
    %v327 = vlaneseq
    %v328 = vshrl.u32 %v327, 7
    %v329 = vsub.s32 %v326, %v328
    %v330 = vrot.slane %v302, %v329
    %v331 = vcombine.low %v309, %v323
    %v332 = vcombine.high %v309, %v323
    %v333 = vcombine.low %v316, %v330
    %v334 = vcombine.high %v316, %v330
    %v359 = vpack.c.bf16 %v151, %v151
    %v360 = vpack.c.bf16 %v152, %v152
    %v361 = vpack.c.bf16 %v153, %v153
    %v362 = vpack.c.bf16 %v154, %v154
    %v363 = vpack.c.bf16 %v187, %v187
    %v364 = vpack.c.bf16 %v188, %v188
    %v365 = vpack.c.bf16 %v189, %v189
    %v366 = vpack.c.bf16 %v190, %v190
    %v367 = vpack.c.bf16 %v223, %v223
    %v368 = vpack.c.bf16 %v224, %v224
    %v369 = vpack.c.bf16 %v225, %v225
    %v370 = vpack.c.bf16 %v226, %v226
    %v371 = vpack.c.bf16 %v259, %v259
    %v372 = vpack.c.bf16 %v260, %v260
    %v373 = vpack.c.bf16 %v261, %v261
    %v374 = vpack.c.bf16 %v262, %v262
    %v375 = vpack.c.bf16 %v295, %v295
    %v376 = vpack.c.bf16 %v296, %v296
    %v377 = vpack.c.bf16 %v297, %v297
    %v378 = vpack.c.bf16 %v298, %v298
    %v379 = vpack.c.bf16 %v331, %v331
    %v380 = vpack.c.bf16 %v332, %v332
    %v381 = vpack.c.bf16 %v333, %v333
    %v382 = vpack.c.bf16 %v334, %v334
    %v383 = vld [vmem:[#allocation2] sm:$0xff]
    %v384 = vld [vmem:[#allocation2 + $0x8] sm:$0xff]
    %v385 = vld [vmem:[#allocation2 + $0x10] sm:$0xff]
    %v386 = vld [vmem:[#allocation2 + $0x18] sm:$0xff]
    %v387 = vld [vmem:[#allocation2 + $0x20] sm:$0xff]
    %v388 = vld [vmem:[#allocation2 + $0x28] sm:$0xff]
    %v389 = vld [vmem:[#allocation2 + $0x30] sm:$0xff]
    %v390 = vld [vmem:[#allocation2 + $0x38] sm:$0xff]
    %v391 = vld [vmem:[#allocation2 + $0x40] sm:$0xff]
    %v392 = vld [vmem:[#allocation2 + $0x48] sm:$0xff]
    %v393 = vld [vmem:[#allocation2 + $0x50] sm:$0xff]
    %v394 = vld [vmem:[#allocation2 + $0x58] sm:$0xff]
    %v395 = vld [vmem:[#allocation2 + $0x60] sm:$0xff]
    %v396 = vld [vmem:[#allocation2 + $0x68] sm:$0xff]
    %v397 = vld [vmem:[#allocation2 + $0x70] sm:$0xff]
    %v398 = vld [vmem:[#allocation2 + $0x78] sm:$0xff]
    %v399 = vld [vmem:[#allocation2 + $0x80] sm:$0xff]
    %v400 = vld [vmem:[#allocation2 + $0x88] sm:$0xff]
    %v401 = vld [vmem:[#allocation2 + $0x90] sm:$0xff]
    %v402 = vld [vmem:[#allocation2 + $0x98] sm:$0xff]
    %v403 = vld [vmem:[#allocation2 + $0xa0] sm:$0xff]
    %v404 = vld [vmem:[#allocation2 + $0xa8] sm:$0xff]
    %v405 = vld [vmem:[#allocation2 + $0xb0] sm:$0xff]
    %v406 = vld [vmem:[#allocation2 + $0xb8] sm:$0xff]
    %v407 = vld [vmem:[#allocation2 + $0xc0] sm:$0xff]
    %v408 = vld [vmem:[#allocation2 + $0xc8] sm:$0xff]
    %v409 = vld [vmem:[#allocation2 + $0xd0] sm:$0xff]
    %v410 = vld [vmem:[#allocation2 + $0xd8] sm:$0xff]
    %v411 = vld [vmem:[#allocation2 + $0xe0] sm:$0xff]
    %v412 = vld [vmem:[#allocation2 + $0xe8] sm:$0xff]
    %v413 = vld [vmem:[#allocation2 + $0xf0] sm:$0xff]
    %v414 = vld [vmem:[#allocation2 + $0xf8] sm:$0xff]
    %v415 = vld [vmem:[#allocation2 + $0x100] sm:$0xff]
    %v416 = vld [vmem:[#allocation2 + $0x108] sm:$0xff]
    %v417 = vld [vmem:[#allocation2 + $0x110] sm:$0xff]
    %v418 = vld [vmem:[#allocation2 + $0x118] sm:$0xff]
    %v419 = vld [vmem:[#allocation2 + $0x120] sm:$0xff]
    %v420 = vld [vmem:[#allocation2 + $0x128] sm:$0xff]
    %v421 = vld [vmem:[#allocation2 + $0x130] sm:$0xff]
    %v422 = vld [vmem:[#allocation2 + $0x138] sm:$0xff]
    %v423 = vld [vmem:[#allocation2 + $0x140] sm:$0xff]
    %v424 = vld [vmem:[#allocation2 + $0x148] sm:$0xff]
    %v425 = vld [vmem:[#allocation2 + $0x150] sm:$0xff]
    %v426 = vld [vmem:[#allocation2 + $0x158] sm:$0xff]
    %v427 = vld [vmem:[#allocation2 + $0x160] sm:$0xff]
    %v428 = vld [vmem:[#allocation2 + $0x168] sm:$0xff]
    %v429 = vld [vmem:[#allocation2 + $0x170] sm:$0xff]
    %v430 = vld [vmem:[#allocation2 + $0x178] sm:$0xff]
    %v431 = vld [vmem:[#allocation2 + $0x180] sm:$0xff]
    %v432 = vld [vmem:[#allocation2 + $0x188] sm:$0xff]
    %v433 = vld [vmem:[#allocation2 + $0x190] sm:$0xff]
    %v434 = vld [vmem:[#allocation2 + $0x198] sm:$0xff]
    %v435 = vld [vmem:[#allocation2 + $0x1a0] sm:$0xff]
    %v436 = vld [vmem:[#allocation2 + $0x1a8] sm:$0xff]
    %v437 = vld [vmem:[#allocation2 + $0x1b0] sm:$0xff]
    %v438 = vld [vmem:[#allocation2 + $0x1b8] sm:$0xff]
    %v439 = vld [vmem:[#allocation2 + $0x1c0] sm:$0xff]
    %v440 = vld [vmem:[#allocation2 + $0x1c8] sm:$0xff]
    %v441 = vld [vmem:[#allocation2 + $0x1d0] sm:$0xff]
    %v442 = vld [vmem:[#allocation2 + $0x1d8] sm:$0xff]
    %v443 = vld [vmem:[#allocation2 + $0x1e0] sm:$0xff]
    %v444 = vld [vmem:[#allocation2 + $0x1e8] sm:$0xff]
    %v445 = vld [vmem:[#allocation2 + $0x1f0] sm:$0xff]
    %v446 = vld [vmem:[#allocation2 + $0x1f8] sm:$0xff]
    %v447 = vld [vmem:[#allocation2 + $0x200] sm:$0xff]
    %v448 = vld [vmem:[#allocation2 + $0x208] sm:$0xff]
    %v449 = vld [vmem:[#allocation2 + $0x210] sm:$0xff]
    %v450 = vld [vmem:[#allocation2 + $0x218] sm:$0xff]
    %v451 = vld [vmem:[#allocation2 + $0x220] sm:$0xff]
    %v452 = vld [vmem:[#allocation2 + $0x228] sm:$0xff]
    %v453 = vld [vmem:[#allocation2 + $0x230] sm:$0xff]
    %v454 = vld [vmem:[#allocation2 + $0x238] sm:$0xff]
    %v455 = vld [vmem:[#allocation2 + $0x240] sm:$0xff]
    %v456 = vld [vmem:[#allocation2 + $0x248] sm:$0xff]
    %v457 = vld [vmem:[#allocation2 + $0x250] sm:$0xff]
    %v458 = vld [vmem:[#allocation2 + $0x258] sm:$0xff]
    %v459 = vld [vmem:[#allocation2 + $0x260] sm:$0xff]
    %v460 = vld [vmem:[#allocation2 + $0x268] sm:$0xff]
    %v461 = vld [vmem:[#allocation2 + $0x270] sm:$0xff]
    %v462 = vld [vmem:[#allocation2 + $0x278] sm:$0xff]
    %v463 = vld [vmem:[#allocation2 + $0x280] sm:$0xff]
    %v464 = vld [vmem:[#allocation2 + $0x288] sm:$0xff]
    %v465 = vld [vmem:[#allocation2 + $0x290] sm:$0xff]
    %v466 = vld [vmem:[#allocation2 + $0x298] sm:$0xff]
    %v467 = vld [vmem:[#allocation2 + $0x2a0] sm:$0xff]
    %v468 = vld [vmem:[#allocation2 + $0x2a8] sm:$0xff]
    %v469 = vld [vmem:[#allocation2 + $0x2b0] sm:$0xff]
    %v470 = vld [vmem:[#allocation2 + $0x2b8] sm:$0xff]
    %v471 = vld [vmem:[#allocation2 + $0x2c0] sm:$0xff]
    %v472 = vld [vmem:[#allocation2 + $0x2c8] sm:$0xff]
    %v473 = vld [vmem:[#allocation2 + $0x2d0] sm:$0xff]
    %v474 = vld [vmem:[#allocation2 + $0x2d8] sm:$0xff]
    %v475 = vld [vmem:[#allocation2 + $0x2e0] sm:$0xff]
    %v476 = vld [vmem:[#allocation2 + $0x2e8] sm:$0xff]
    %v477 = vld [vmem:[#allocation2 + $0x2f0] sm:$0xff]
    %v478 = vld [vmem:[#allocation2 + $0x2f8] sm:$0xff]
    %v479 = vld [vmem:[#allocation2 + $0x300] sm:$0xff]
    %v480 = vld [vmem:[#allocation2 + $0x308] sm:$0xff]
    %v481 = vld [vmem:[#allocation2 + $0x310] sm:$0xff]
    %v482 = vld [vmem:[#allocation2 + $0x318] sm:$0xff]
    %v483 = vld [vmem:[#allocation2 + $0x320] sm:$0xff]
    %v484 = vld [vmem:[#allocation2 + $0x328] sm:$0xff]
    %v485 = vld [vmem:[#allocation2 + $0x330] sm:$0xff]
    %v486 = vld [vmem:[#allocation2 + $0x338] sm:$0xff]
    %v487 = vld [vmem:[#allocation2 + $0x340] sm:$0xff]
    %v488 = vld [vmem:[#allocation2 + $0x348] sm:$0xff]
    %v489 = vld [vmem:[#allocation2 + $0x350] sm:$0xff]
    %v490 = vld [vmem:[#allocation2 + $0x358] sm:$0xff]
    %v491 = vld [vmem:[#allocation2 + $0x360] sm:$0xff]
    %v492 = vld [vmem:[#allocation2 + $0x368] sm:$0xff]
    %v493 = vld [vmem:[#allocation2 + $0x370] sm:$0xff]
    %v494 = vld [vmem:[#allocation2 + $0x378] sm:$0xff]
    %v495 = vld [vmem:[#allocation2 + $0x380] sm:$0xff]
    %v496 = vld [vmem:[#allocation2 + $0x388] sm:$0xff]
    %v497 = vld [vmem:[#allocation2 + $0x390] sm:$0xff]
    %v498 = vld [vmem:[#allocation2 + $0x398] sm:$0xff]
    %v499 = vld [vmem:[#allocation2 + $0x3a0] sm:$0xff]
    %v500 = vld [vmem:[#allocation2 + $0x3a8] sm:$0xff]
    %v501 = vld [vmem:[#allocation2 + $0x3b0] sm:$0xff]
    %v502 = vld [vmem:[#allocation2 + $0x3b8] sm:$0xff]
    %v503 = vld [vmem:[#allocation2 + $0x3c0] sm:$0xff]
    %v504 = vld [vmem:[#allocation2 + $0x3c8] sm:$0xff]
    %v505 = vld [vmem:[#allocation2 + $0x3d0] sm:$0xff]
    %v506 = vld [vmem:[#allocation2 + $0x3d8] sm:$0xff]
    %v507 = vld [vmem:[#allocation2 + $0x3e0] sm:$0xff]
    %v508 = vld [vmem:[#allocation2 + $0x3e8] sm:$0xff]
    %v509 = vld [vmem:[#allocation2 + $0x3f0] sm:$0xff]
    %v510 = vld [vmem:[#allocation2 + $0x3f8] sm:$0xff]
    %v511 = vld [vmem:[#allocation2 + $0x400] sm:$0xff]
    %v512 = vld [vmem:[#allocation2 + $0x408] sm:$0xff]
    %v513 = vld [vmem:[#allocation2 + $0x410] sm:$0xff]
    %v514 = vld [vmem:[#allocation2 + $0x418] sm:$0xff]
    %v515 = vld [vmem:[#allocation2 + $0x420] sm:$0xff]
    %v516 = vld [vmem:[#allocation2 + $0x428] sm:$0xff]
    %v517 = vld [vmem:[#allocation2 + $0x430] sm:$0xff]
    %v518 = vld [vmem:[#allocation2 + $0x438] sm:$0xff]
    %v519 = vld [vmem:[#allocation2 + $0x440] sm:$0xff]
    %v520 = vld [vmem:[#allocation2 + $0x448] sm:$0xff]
    %v521 = vld [vmem:[#allocation2 + $0x450] sm:$0xff]
    %v522 = vld [vmem:[#allocation2 + $0x458] sm:$0xff]
    %v523 = vld [vmem:[#allocation2 + $0x460] sm:$0xff]
    %v524 = vld [vmem:[#allocation2 + $0x468] sm:$0xff]
    %v525 = vld [vmem:[#allocation2 + $0x470] sm:$0xff]
    %v526 = vld [vmem:[#allocation2 + $0x478] sm:$0xff]
    %v527 = vld [vmem:[#allocation2 + $0x480] sm:$0xff]
    %v528 = vld [vmem:[#allocation2 + $0x488] sm:$0xff]
    %v529 = vld [vmem:[#allocation2 + $0x490] sm:$0xff]
    %v530 = vld [vmem:[#allocation2 + $0x498] sm:$0xff]
    %v531 = vld [vmem:[#allocation2 + $0x4a0] sm:$0xff]
    %v532 = vld [vmem:[#allocation2 + $0x4a8] sm:$0xff]
    %v533 = vld [vmem:[#allocation2 + $0x4b0] sm:$0xff]
    %v534 = vld [vmem:[#allocation2 + $0x4b8] sm:$0xff]
    %v535 = vld [vmem:[#allocation2 + $0x4c0] sm:$0xff]
    %v536 = vld [vmem:[#allocation2 + $0x4c8] sm:$0xff]
    %v537 = vld [vmem:[#allocation2 + $0x4d0] sm:$0xff]
    %v538 = vld [vmem:[#allocation2 + $0x4d8] sm:$0xff]
    %v539 = vld [vmem:[#allocation2 + $0x4e0] sm:$0xff]
    %v540 = vld [vmem:[#allocation2 + $0x4e8] sm:$0xff]
    %v541 = vld [vmem:[#allocation2 + $0x4f0] sm:$0xff]
    %v542 = vld [vmem:[#allocation2 + $0x4f8] sm:$0xff]
    %v543 = vld [vmem:[#allocation2 + $0x500] sm:$0xff]
    %v544 = vld [vmem:[#allocation2 + $0x508] sm:$0xff]
    %v545 = vld [vmem:[#allocation2 + $0x510] sm:$0xff]
    %v546 = vld [vmem:[#allocation2 + $0x518] sm:$0xff]
    %v547 = vld [vmem:[#allocation2 + $0x520] sm:$0xff]
    %v548 = vld [vmem:[#allocation2 + $0x528] sm:$0xff]
    %v549 = vld [vmem:[#allocation2 + $0x530] sm:$0xff]
    %v550 = vld [vmem:[#allocation2 + $0x538] sm:$0xff]
    %v551 = vld [vmem:[#allocation2 + $0x540] sm:$0xff]
    %v552 = vld [vmem:[#allocation2 + $0x548] sm:$0xff]
    %v553 = vld [vmem:[#allocation2 + $0x550] sm:$0xff]
    %v554 = vld [vmem:[#allocation2 + $0x558] sm:$0xff]
    %v555 = vld [vmem:[#allocation2 + $0x560] sm:$0xff]
    %v556 = vld [vmem:[#allocation2 + $0x568] sm:$0xff]
    %v557 = vld [vmem:[#allocation2 + $0x570] sm:$0xff]
    %v558 = vld [vmem:[#allocation2 + $0x578] sm:$0xff]
    %v559 = vld [vmem:[#allocation2 + $0x580] sm:$0xff]
    %v560 = vld [vmem:[#allocation2 + $0x588] sm:$0xff]
    %v561 = vld [vmem:[#allocation2 + $0x590] sm:$0xff]
    %v562 = vld [vmem:[#allocation2 + $0x598] sm:$0xff]
    %v563 = vld [vmem:[#allocation2 + $0x5a0] sm:$0xff]
    %v564 = vld [vmem:[#allocation2 + $0x5a8] sm:$0xff]
    %v565 = vld [vmem:[#allocation2 + $0x5b0] sm:$0xff]
    %v566 = vld [vmem:[#allocation2 + $0x5b8] sm:$0xff]
    %v567 = vld [vmem:[#allocation2 + $0x5c0] sm:$0xff]
    %v568 = vld [vmem:[#allocation2 + $0x5c8] sm:$0xff]
    %v569 = vld [vmem:[#allocation2 + $0x5d0] sm:$0xff]
    %v570 = vld [vmem:[#allocation2 + $0x5d8] sm:$0xff]
    %v571 = vld [vmem:[#allocation2 + $0x5e0] sm:$0xff]
    %v572 = vld [vmem:[#allocation2 + $0x5e8] sm:$0xff]
    %v573 = vld [vmem:[#allocation2 + $0x5f0] sm:$0xff]
    %v574 = vld [vmem:[#allocation2 + $0x5f8] sm:$0xff]
    %v575 = vld [vmem:[#allocation2 + $0x600] sm:$0xff]
    %v576 = vld [vmem:[#allocation2 + $0x608] sm:$0xff]
    %v577 = vld [vmem:[#allocation2 + $0x610] sm:$0xff]
    %v578 = vld [vmem:[#allocation2 + $0x618] sm:$0xff]
    %v579 = vld [vmem:[#allocation2 + $0x620] sm:$0xff]
    %v580 = vld [vmem:[#allocation2 + $0x628] sm:$0xff]
    %v581 = vld [vmem:[#allocation2 + $0x630] sm:$0xff]
    %v582 = vld [vmem:[#allocation2 + $0x638] sm:$0xff]
    %v583 = vld [vmem:[#allocation2 + $0x640] sm:$0xff]
    %v584 = vld [vmem:[#allocation2 + $0x648] sm:$0xff]
    %v585 = vld [vmem:[#allocation2 + $0x650] sm:$0xff]
    %v586 = vld [vmem:[#allocation2 + $0x658] sm:$0xff]
    %v587 = vld [vmem:[#allocation2 + $0x660] sm:$0xff]
    %v588 = vld [vmem:[#allocation2 + $0x668] sm:$0xff]
    %v589 = vld [vmem:[#allocation2 + $0x670] sm:$0xff]
    %v590 = vld [vmem:[#allocation2 + $0x678] sm:$0xff]
    %v591 = vld [vmem:[#allocation2 + $0x680] sm:$0xff]
    %v592 = vld [vmem:[#allocation2 + $0x688] sm:$0xff]
    %v593 = vld [vmem:[#allocation2 + $0x690] sm:$0xff]
    %v594 = vld [vmem:[#allocation2 + $0x698] sm:$0xff]
    %v595 = vld [vmem:[#allocation2 + $0x6a0] sm:$0xff]
    %v596 = vld [vmem:[#allocation2 + $0x6a8] sm:$0xff]
    %v597 = vld [vmem:[#allocation2 + $0x6b0] sm:$0xff]
    %v598 = vld [vmem:[#allocation2 + $0x6b8] sm:$0xff]
    %v599 = vld [vmem:[#allocation2 + $0x6c0] sm:$0xff]
    %v600 = vld [vmem:[#allocation2 + $0x6c8] sm:$0xff]
    %v601 = vld [vmem:[#allocation2 + $0x6d0] sm:$0xff]
    %v602 = vld [vmem:[#allocation2 + $0x6d8] sm:$0xff]
    %v603 = vld [vmem:[#allocation2 + $0x6e0] sm:$0xff]
    %v604 = vld [vmem:[#allocation2 + $0x6e8] sm:$0xff]
    %v605 = vld [vmem:[#allocation2 + $0x6f0] sm:$0xff]
    %v606 = vld [vmem:[#allocation2 + $0x6f8] sm:$0xff]
    %v607 = vld [vmem:[#allocation2 + $0x700] sm:$0xff]
    %v608 = vld [vmem:[#allocation2 + $0x708] sm:$0xff]
    %v609 = vld [vmem:[#allocation2 + $0x710] sm:$0xff]
    %v610 = vld [vmem:[#allocation2 + $0x718] sm:$0xff]
    %v611 = vld [vmem:[#allocation2 + $0x720] sm:$0xff]
    %v612 = vld [vmem:[#allocation2 + $0x728] sm:$0xff]
    %v613 = vld [vmem:[#allocation2 + $0x730] sm:$0xff]
    %v614 = vld [vmem:[#allocation2 + $0x738] sm:$0xff]
    %v615 = vld [vmem:[#allocation2 + $0x740] sm:$0xff]
    %v616 = vld [vmem:[#allocation2 + $0x748] sm:$0xff]
    %v617 = vld [vmem:[#allocation2 + $0x750] sm:$0xff]
    %v618 = vld [vmem:[#allocation2 + $0x758] sm:$0xff]
    %v619 = vld [vmem:[#allocation2 + $0x760] sm:$0xff]
    %v620 = vld [vmem:[#allocation2 + $0x768] sm:$0xff]
    %v621 = vld [vmem:[#allocation2 + $0x770] sm:$0xff]
    %v622 = vld [vmem:[#allocation2 + $0x778] sm:$0xff]
    %v623 = vld [vmem:[#allocation2 + $0x780] sm:$0xff]
    %v624 = vld [vmem:[#allocation2 + $0x788] sm:$0xff]
    %v625 = vld [vmem:[#allocation2 + $0x790] sm:$0xff]
    %v626 = vld [vmem:[#allocation2 + $0x798] sm:$0xff]
    %v627 = vld [vmem:[#allocation2 + $0x7a0] sm:$0xff]
    %v628 = vld [vmem:[#allocation2 + $0x7a8] sm:$0xff]
    %v629 = vld [vmem:[#allocation2 + $0x7b0] sm:$0xff]
    %v630 = vld [vmem:[#allocation2 + $0x7b8] sm:$0xff]
    %v631 = vld [vmem:[#allocation2 + $0x7c0] sm:$0xff]
    %v632 = vld [vmem:[#allocation2 + $0x7c8] sm:$0xff]
    %v633 = vld [vmem:[#allocation2 + $0x7d0] sm:$0xff]
    %v634 = vld [vmem:[#allocation2 + $0x7d8] sm:$0xff]
    %v635 = vld [vmem:[#allocation2 + $0x7e0] sm:$0xff]
    %v636 = vld [vmem:[#allocation2 + $0x7e8] sm:$0xff]
    %v637 = vld [vmem:[#allocation2 + $0x7f0] sm:$0xff]
    %v638 = vld [vmem:[#allocation2 + $0x7f8] sm:$0xff]
    %v639 = vld [vmem:[#allocation2 + $0x800] sm:$0xff]
    %v640 = vld [vmem:[#allocation2 + $0x808] sm:$0xff]
    %v641 = vld [vmem:[#allocation2 + $0x810] sm:$0xff]
    %v642 = vld [vmem:[#allocation2 + $0x818] sm:$0xff]
    %v643 = vld [vmem:[#allocation2 + $0x820] sm:$0xff]
    %v644 = vld [vmem:[#allocation2 + $0x828] sm:$0xff]
    %v645 = vld [vmem:[#allocation2 + $0x830] sm:$0xff]
    %v646 = vld [vmem:[#allocation2 + $0x838] sm:$0xff]
    %v647 = vld [vmem:[#allocation2 + $0x840] sm:$0xff]
    %v648 = vld [vmem:[#allocation2 + $0x848] sm:$0xff]
    %v649 = vld [vmem:[#allocation2 + $0x850] sm:$0xff]
    %v650 = vld [vmem:[#allocation2 + $0x858] sm:$0xff]
    %v651 = vld [vmem:[#allocation2 + $0x860] sm:$0xff]
    %v652 = vld [vmem:[#allocation2 + $0x868] sm:$0xff]
    %v653 = vld [vmem:[#allocation2 + $0x870] sm:$0xff]
    %v654 = vld [vmem:[#allocation2 + $0x878] sm:$0xff]
    %v655 = vld [vmem:[#allocation2 + $0x880] sm:$0xff]
    %v656 = vld [vmem:[#allocation2 + $0x888] sm:$0xff]
    %v657 = vld [vmem:[#allocation2 + $0x890] sm:$0xff]
    %v658 = vld [vmem:[#allocation2 + $0x898] sm:$0xff]
    %v659 = vld [vmem:[#allocation2 + $0x8a0] sm:$0xff]
    %v660 = vld [vmem:[#allocation2 + $0x8a8] sm:$0xff]
    %v661 = vld [vmem:[#allocation2 + $0x8b0] sm:$0xff]
    %v662 = vld [vmem:[#allocation2 + $0x8b8] sm:$0xff]
    %v663 = vld [vmem:[#allocation2 + $0x8c0] sm:$0xff]
    %v664 = vld [vmem:[#allocation2 + $0x8c8] sm:$0xff]
    %v665 = vld [vmem:[#allocation2 + $0x8d0] sm:$0xff]
    %v666 = vld [vmem:[#allocation2 + $0x8d8] sm:$0xff]
    %v667 = vld [vmem:[#allocation2 + $0x8e0] sm:$0xff]
    %v668 = vld [vmem:[#allocation2 + $0x8e8] sm:$0xff]
    %v669 = vld [vmem:[#allocation2 + $0x8f0] sm:$0xff]
    %v670 = vld [vmem:[#allocation2 + $0x8f8] sm:$0xff]
    %v671 = vld [vmem:[#allocation2 + $0x900] sm:$0xff]
    %v672 = vld [vmem:[#allocation2 + $0x908] sm:$0xff]
    %v673 = vld [vmem:[#allocation2 + $0x910] sm:$0xff]
    %v674 = vld [vmem:[#allocation2 + $0x918] sm:$0xff]
    %v675 = vld [vmem:[#allocation2 + $0x920] sm:$0xff]
    %v676 = vld [vmem:[#allocation2 + $0x928] sm:$0xff]
    %v677 = vld [vmem:[#allocation2 + $0x930] sm:$0xff]
    %v678 = vld [vmem:[#allocation2 + $0x938] sm:$0xff]
    %v679 = vld [vmem:[#allocation2 + $0x940] sm:$0xff]
    %v680 = vld [vmem:[#allocation2 + $0x948] sm:$0xff]
    %v681 = vld [vmem:[#allocation2 + $0x950] sm:$0xff]
    %v682 = vld [vmem:[#allocation2 + $0x958] sm:$0xff]
    %v683 = vld [vmem:[#allocation2 + $0x960] sm:$0xff]
    %v684 = vld [vmem:[#allocation2 + $0x968] sm:$0xff]
    %v685 = vld [vmem:[#allocation2 + $0x970] sm:$0xff]
    %v686 = vld [vmem:[#allocation2 + $0x978] sm:$0xff]
    %v687 = vld [vmem:[#allocation2 + $0x980] sm:$0xff]
    %v688 = vld [vmem:[#allocation2 + $0x988] sm:$0xff]
    %v689 = vld [vmem:[#allocation2 + $0x990] sm:$0xff]
    %v690 = vld [vmem:[#allocation2 + $0x998] sm:$0xff]
    %v691 = vld [vmem:[#allocation2 + $0x9a0] sm:$0xff]
    %v692 = vld [vmem:[#allocation2 + $0x9a8] sm:$0xff]
    %v693 = vld [vmem:[#allocation2 + $0x9b0] sm:$0xff]
    %v694 = vld [vmem:[#allocation2 + $0x9b8] sm:$0xff]
    %v695 = vld [vmem:[#allocation2 + $0x9c0] sm:$0xff]
    %v696 = vld [vmem:[#allocation2 + $0x9c8] sm:$0xff]
    %v697 = vld [vmem:[#allocation2 + $0x9d0] sm:$0xff]
    %v698 = vld [vmem:[#allocation2 + $0x9d8] sm:$0xff]
    %v699 = vld [vmem:[#allocation2 + $0x9e0] sm:$0xff]
    %v700 = vld [vmem:[#allocation2 + $0x9e8] sm:$0xff]
    %v701 = vld [vmem:[#allocation2 + $0x9f0] sm:$0xff]
    %v702 = vld [vmem:[#allocation2 + $0x9f8] sm:$0xff]
    %v703 = vld [vmem:[#allocation2 + $0xa00] sm:$0xff]
    %v704 = vld [vmem:[#allocation2 + $0xa08] sm:$0xff]
    %v705 = vld [vmem:[#allocation2 + $0xa10] sm:$0xff]
    %v706 = vld [vmem:[#allocation2 + $0xa18] sm:$0xff]
    %v707 = vld [vmem:[#allocation2 + $0xa20] sm:$0xff]
    %v708 = vld [vmem:[#allocation2 + $0xa28] sm:$0xff]
    %v709 = vld [vmem:[#allocation2 + $0xa30] sm:$0xff]
    %v710 = vld [vmem:[#allocation2 + $0xa38] sm:$0xff]
    %v711 = vld [vmem:[#allocation2 + $0xa40] sm:$0xff]
    %v712 = vld [vmem:[#allocation2 + $0xa48] sm:$0xff]
    %v713 = vld [vmem:[#allocation2 + $0xa50] sm:$0xff]
    %v714 = vld [vmem:[#allocation2 + $0xa58] sm:$0xff]
    %v715 = vld [vmem:[#allocation2 + $0xa60] sm:$0xff]
    %v716 = vld [vmem:[#allocation2 + $0xa68] sm:$0xff]
    %v717 = vld [vmem:[#allocation2 + $0xa70] sm:$0xff]
    %v718 = vld [vmem:[#allocation2 + $0xa78] sm:$0xff]
    %v719 = vld [vmem:[#allocation2 + $0xa80] sm:$0xff]
    %v720 = vld [vmem:[#allocation2 + $0xa88] sm:$0xff]
    %v721 = vld [vmem:[#allocation2 + $0xa90] sm:$0xff]
    %v722 = vld [vmem:[#allocation2 + $0xa98] sm:$0xff]
    %v723 = vld [vmem:[#allocation2 + $0xaa0] sm:$0xff]
    %v724 = vld [vmem:[#allocation2 + $0xaa8] sm:$0xff]
    %v725 = vld [vmem:[#allocation2 + $0xab0] sm:$0xff]
    %v726 = vld [vmem:[#allocation2 + $0xab8] sm:$0xff]
    %v727 = vld [vmem:[#allocation2 + $0xac0] sm:$0xff]
    %v728 = vld [vmem:[#allocation2 + $0xac8] sm:$0xff]
    %v729 = vld [vmem:[#allocation2 + $0xad0] sm:$0xff]
    %v730 = vld [vmem:[#allocation2 + $0xad8] sm:$0xff]
    %v731 = vld [vmem:[#allocation2 + $0xae0] sm:$0xff]
    %v732 = vld [vmem:[#allocation2 + $0xae8] sm:$0xff]
    %v733 = vld [vmem:[#allocation2 + $0xaf0] sm:$0xff]
    %v734 = vld [vmem:[#allocation2 + $0xaf8] sm:$0xff]
    %v735 = vld [vmem:[#allocation2 + $0xb00] sm:$0xff]
    %v736 = vld [vmem:[#allocation2 + $0xb08] sm:$0xff]
    %v737 = vld [vmem:[#allocation2 + $0xb10] sm:$0xff]
    %v738 = vld [vmem:[#allocation2 + $0xb18] sm:$0xff]
    %v739 = vld [vmem:[#allocation2 + $0xb20] sm:$0xff]
    %v740 = vld [vmem:[#allocation2 + $0xb28] sm:$0xff]
    %v741 = vld [vmem:[#allocation2 + $0xb30] sm:$0xff]
    %v742 = vld [vmem:[#allocation2 + $0xb38] sm:$0xff]
    %v743 = vld [vmem:[#allocation2 + $0xb40] sm:$0xff]
    %v744 = vld [vmem:[#allocation2 + $0xb48] sm:$0xff]
    %v745 = vld [vmem:[#allocation2 + $0xb50] sm:$0xff]
    %v746 = vld [vmem:[#allocation2 + $0xb58] sm:$0xff]
    %v747 = vld [vmem:[#allocation2 + $0xb60] sm:$0xff]
    %v748 = vld [vmem:[#allocation2 + $0xb68] sm:$0xff]
    %v749 = vld [vmem:[#allocation2 + $0xb70] sm:$0xff]
    %v750 = vld [vmem:[#allocation2 + $0xb78] sm:$0xff]
    %v751 = vld [vmem:[#allocation2 + $0xb80] sm:$0xff]
    %v752 = vld [vmem:[#allocation2 + $0xb88] sm:$0xff]
    %v753 = vld [vmem:[#allocation2 + $0xb90] sm:$0xff]
    %v754 = vld [vmem:[#allocation2 + $0xb98] sm:$0xff]
    %v755 = vld [vmem:[#allocation2 + $0xba0] sm:$0xff]
    %v756 = vld [vmem:[#allocation2 + $0xba8] sm:$0xff]
    %v757 = vld [vmem:[#allocation2 + $0xbb0] sm:$0xff]
    %v758 = vld [vmem:[#allocation2 + $0xbb8] sm:$0xff]
    %v759 = vld [vmem:[#allocation2 + $0xbc0] sm:$0xff]
    %v760 = vld [vmem:[#allocation2 + $0xbc8] sm:$0xff]
    %v761 = vld [vmem:[#allocation2 + $0xbd0] sm:$0xff]
    %v762 = vld [vmem:[#allocation2 + $0xbd8] sm:$0xff]
    %v763 = vld [vmem:[#allocation2 + $0xbe0] sm:$0xff]
    %v764 = vld [vmem:[#allocation2 + $0xbe8] sm:$0xff]
    %v765 = vld [vmem:[#allocation2 + $0xbf0] sm:$0xff]
    %v766 = vld [vmem:[#allocation2 + $0xbf8] sm:$0xff]
    %v767 = vld [vmem:[#allocation4] sm:$0x3]
    %v769 = vlaneseq
    %v770 = vshrl.u32 %v769, 7
    %v771 = vsub.s32 0, %v770
    %v772 = vrot.slane %v767, %v771
    %v773 = vlaneseq
    %v774 = vshrl.u32 %v773, 7
    %v775 = vsub.s32 1, %v774
    %v776 = vrot.slane %v767, %v775
    %v1163 = vunpack.c.l.b16 %v383
    %v1164 = vunpack.c.h.b16 %v383
    %v1165 = vunpack.c.l.b16 %v384
    %v1166 = vunpack.c.h.b16 %v384
    %v1167 = vunpack.c.l.b16 %v385
    %v1168 = vunpack.c.h.b16 %v385
    %v1169 = vunpack.c.l.b16 %v386
    %v1170 = vunpack.c.h.b16 %v386
    %v1171 = vunpack.c.l.b16 %v387
    %v1172 = vunpack.c.h.b16 %v387
    %v1173 = vunpack.c.l.b16 %v388
    %v1174 = vunpack.c.h.b16 %v388
    %v1175 = vunpack.c.l.b16 %v389
    %v1176 = vunpack.c.h.b16 %v389
    %v1177 = vunpack.c.l.b16 %v390
    %v1178 = vunpack.c.h.b16 %v390
    %v1179 = vunpack.c.l.b16 %v391
    %v1180 = vunpack.c.h.b16 %v391
    %v1181 = vunpack.c.l.b16 %v392
    %v1182 = vunpack.c.h.b16 %v392
    %v1183 = vunpack.c.l.b16 %v393
    %v1184 = vunpack.c.h.b16 %v393
    %v1185 = vunpack.c.l.b16 %v394
    %v1186 = vunpack.c.h.b16 %v394
    %v1187 = vunpack.c.l.b16 %v395
    %v1188 = vunpack.c.h.b16 %v395
    %v1189 = vunpack.c.l.b16 %v396
    %v1190 = vunpack.c.h.b16 %v396
    %v1191 = vunpack.c.l.b16 %v397
    %v1192 = vunpack.c.h.b16 %v397
    %v1193 = vunpack.c.l.b16 %v398
    %v1194 = vunpack.c.h.b16 %v398
    %v1195 = vunpack.c.l.b16 %v399
    %v1196 = vunpack.c.h.b16 %v399
    %v1197 = vunpack.c.l.b16 %v400
    %v1198 = vunpack.c.h.b16 %v400
    %v1199 = vunpack.c.l.b16 %v401
    %v1200 = vunpack.c.h.b16 %v401
    %v1201 = vunpack.c.l.b16 %v402
    %v1202 = vunpack.c.h.b16 %v402
    %v1203 = vunpack.c.l.b16 %v403
    %v1204 = vunpack.c.h.b16 %v403
    %v1205 = vunpack.c.l.b16 %v404
    %v1206 = vunpack.c.h.b16 %v404
    %v1207 = vunpack.c.l.b16 %v405
    %v1208 = vunpack.c.h.b16 %v405
    %v1209 = vunpack.c.l.b16 %v406
    %v1210 = vunpack.c.h.b16 %v406
    %v1211 = vunpack.c.l.b16 %v407
    %v1212 = vunpack.c.h.b16 %v407
    %v1213 = vunpack.c.l.b16 %v408
    %v1214 = vunpack.c.h.b16 %v408
    %v1215 = vunpack.c.l.b16 %v409
    %v1216 = vunpack.c.h.b16 %v409
    %v1217 = vunpack.c.l.b16 %v410
    %v1218 = vunpack.c.h.b16 %v410
    %v1219 = vunpack.c.l.b16 %v411
    %v1220 = vunpack.c.h.b16 %v411
    %v1221 = vunpack.c.l.b16 %v412
    %v1222 = vunpack.c.h.b16 %v412
    %v1223 = vunpack.c.l.b16 %v413
    %v1224 = vunpack.c.h.b16 %v413
    %v1225 = vunpack.c.l.b16 %v414
    %v1226 = vunpack.c.h.b16 %v414
    %v1227 = vunpack.c.l.b16 %v415
    %v1228 = vunpack.c.h.b16 %v415
    %v1229 = vunpack.c.l.b16 %v416
    %v1230 = vunpack.c.h.b16 %v416
    %v1231 = vunpack.c.l.b16 %v417
    %v1232 = vunpack.c.h.b16 %v417
    %v1233 = vunpack.c.l.b16 %v418
    %v1234 = vunpack.c.h.b16 %v418
    %v1235 = vunpack.c.l.b16 %v419
    %v1236 = vunpack.c.h.b16 %v419
    %v1237 = vunpack.c.l.b16 %v420
    %v1238 = vunpack.c.h.b16 %v420
    %v1239 = vunpack.c.l.b16 %v421
    %v1240 = vunpack.c.h.b16 %v421
    %v1241 = vunpack.c.l.b16 %v422
    %v1242 = vunpack.c.h.b16 %v422
    %v1243 = vunpack.c.l.b16 %v423
    %v1244 = vunpack.c.h.b16 %v423
    %v1245 = vunpack.c.l.b16 %v424
    %v1246 = vunpack.c.h.b16 %v424
    %v1247 = vunpack.c.l.b16 %v425
    %v1248 = vunpack.c.h.b16 %v425
    %v1249 = vunpack.c.l.b16 %v426
    %v1250 = vunpack.c.h.b16 %v426
    %v1251 = vunpack.c.l.b16 %v427
    %v1252 = vunpack.c.h.b16 %v427
    %v1253 = vunpack.c.l.b16 %v428
    %v1254 = vunpack.c.h.b16 %v428
    %v1255 = vunpack.c.l.b16 %v429
    %v1256 = vunpack.c.h.b16 %v429
    %v1257 = vunpack.c.l.b16 %v430
    %v1258 = vunpack.c.h.b16 %v430
    %v1259 = vunpack.c.l.b16 %v431
    %v1260 = vunpack.c.h.b16 %v431
    %v1261 = vunpack.c.l.b16 %v432
    %v1262 = vunpack.c.h.b16 %v432
    %v1263 = vunpack.c.l.b16 %v433
    %v1264 = vunpack.c.h.b16 %v433
    %v1265 = vunpack.c.l.b16 %v434
    %v1266 = vunpack.c.h.b16 %v434
    %v1267 = vunpack.c.l.b16 %v435
    %v1268 = vunpack.c.h.b16 %v435
    %v1269 = vunpack.c.l.b16 %v436
    %v1270 = vunpack.c.h.b16 %v436
    %v1271 = vunpack.c.l.b16 %v437
    %v1272 = vunpack.c.h.b16 %v437
    %v1273 = vunpack.c.l.b16 %v438
    %v1274 = vunpack.c.h.b16 %v438
    %v1275 = vunpack.c.l.b16 %v439
    %v1276 = vunpack.c.h.b16 %v439
    %v1277 = vunpack.c.l.b16 %v440
    %v1278 = vunpack.c.h.b16 %v440
    %v1279 = vunpack.c.l.b16 %v441
    %v1280 = vunpack.c.h.b16 %v441
    %v1281 = vunpack.c.l.b16 %v442
    %v1282 = vunpack.c.h.b16 %v442
    %v1283 = vunpack.c.l.b16 %v443
    %v1284 = vunpack.c.h.b16 %v443
    %v1285 = vunpack.c.l.b16 %v444
    %v1286 = vunpack.c.h.b16 %v444
    %v1287 = vunpack.c.l.b16 %v445
    %v1288 = vunpack.c.h.b16 %v445
    %v1289 = vunpack.c.l.b16 %v446
    %v1290 = vunpack.c.h.b16 %v446
    %v1291 = vunpack.c.l.b16 %v447
    %v1292 = vunpack.c.h.b16 %v447
    %v1293 = vunpack.c.l.b16 %v448
    %v1294 = vunpack.c.h.b16 %v448
    %v1295 = vunpack.c.l.b16 %v449
    %v1296 = vunpack.c.h.b16 %v449
    %v1297 = vunpack.c.l.b16 %v450
    %v1298 = vunpack.c.h.b16 %v450
    %v1299 = vunpack.c.l.b16 %v451
    %v1300 = vunpack.c.h.b16 %v451
    %v1301 = vunpack.c.l.b16 %v452
    %v1302 = vunpack.c.h.b16 %v452
    %v1303 = vunpack.c.l.b16 %v453
    %v1304 = vunpack.c.h.b16 %v453
    %v1305 = vunpack.c.l.b16 %v454
    %v1306 = vunpack.c.h.b16 %v454
    %v1307 = vunpack.c.l.b16 %v455
    %v1308 = vunpack.c.h.b16 %v455
    %v1309 = vunpack.c.l.b16 %v456
    %v1310 = vunpack.c.h.b16 %v456
    %v1311 = vunpack.c.l.b16 %v457
    %v1312 = vunpack.c.h.b16 %v457
    %v1313 = vunpack.c.l.b16 %v458
    %v1314 = vunpack.c.h.b16 %v458
    %v1315 = vunpack.c.l.b16 %v459
    %v1316 = vunpack.c.h.b16 %v459
    %v1317 = vunpack.c.l.b16 %v460
    %v1318 = vunpack.c.h.b16 %v460
    %v1319 = vunpack.c.l.b16 %v461
    %v1320 = vunpack.c.h.b16 %v461
    %v1321 = vunpack.c.l.b16 %v462
    %v1322 = vunpack.c.h.b16 %v462
    %v1323 = vunpack.c.l.b16 %v463
    %v1324 = vunpack.c.h.b16 %v463
    %v1325 = vunpack.c.l.b16 %v464
    %v1326 = vunpack.c.h.b16 %v464
    %v1327 = vunpack.c.l.b16 %v465
    %v1328 = vunpack.c.h.b16 %v465
    %v1329 = vunpack.c.l.b16 %v466
    %v1330 = vunpack.c.h.b16 %v466
    %v1331 = vunpack.c.l.b16 %v467
    %v1332 = vunpack.c.h.b16 %v467
    %v1333 = vunpack.c.l.b16 %v468
    %v1334 = vunpack.c.h.b16 %v468
    %v1335 = vunpack.c.l.b16 %v469
    %v1336 = vunpack.c.h.b16 %v469
    %v1337 = vunpack.c.l.b16 %v470
    %v1338 = vunpack.c.h.b16 %v470
    %v1339 = vunpack.c.l.b16 %v471
    %v1340 = vunpack.c.h.b16 %v471
    %v1341 = vunpack.c.l.b16 %v472
    %v1342 = vunpack.c.h.b16 %v472
    %v1343 = vunpack.c.l.b16 %v473
    %v1344 = vunpack.c.h.b16 %v473
    %v1345 = vunpack.c.l.b16 %v474
    %v1346 = vunpack.c.h.b16 %v474
    %v1347 = vunpack.c.l.b16 %v475
    %v1348 = vunpack.c.h.b16 %v475
    %v1349 = vunpack.c.l.b16 %v476
    %v1350 = vunpack.c.h.b16 %v476
    %v1351 = vunpack.c.l.b16 %v477
    %v1352 = vunpack.c.h.b16 %v477
    %v1353 = vunpack.c.l.b16 %v478
    %v1354 = vunpack.c.h.b16 %v478
    %v1355 = vunpack.c.l.b16 %v479
    %v1356 = vunpack.c.h.b16 %v479
    %v1357 = vunpack.c.l.b16 %v480
    %v1358 = vunpack.c.h.b16 %v480
    %v1359 = vunpack.c.l.b16 %v481
    %v1360 = vunpack.c.h.b16 %v481
    %v1361 = vunpack.c.l.b16 %v482
    %v1362 = vunpack.c.h.b16 %v482
    %v1363 = vunpack.c.l.b16 %v483
    %v1364 = vunpack.c.h.b16 %v483
    %v1365 = vunpack.c.l.b16 %v484
    %v1366 = vunpack.c.h.b16 %v484
    %v1367 = vunpack.c.l.b16 %v485
    %v1368 = vunpack.c.h.b16 %v485
    %v1369 = vunpack.c.l.b16 %v486
    %v1370 = vunpack.c.h.b16 %v486
    %v1371 = vunpack.c.l.b16 %v487
    %v1372 = vunpack.c.h.b16 %v487
    %v1373 = vunpack.c.l.b16 %v488
    %v1374 = vunpack.c.h.b16 %v488
    %v1375 = vunpack.c.l.b16 %v489
    %v1376 = vunpack.c.h.b16 %v489
    %v1377 = vunpack.c.l.b16 %v490
    %v1378 = vunpack.c.h.b16 %v490
    %v1379 = vunpack.c.l.b16 %v491
    %v1380 = vunpack.c.h.b16 %v491
    %v1381 = vunpack.c.l.b16 %v492
    %v1382 = vunpack.c.h.b16 %v492
    %v1383 = vunpack.c.l.b16 %v493
    %v1384 = vunpack.c.h.b16 %v493
    %v1385 = vunpack.c.l.b16 %v494
    %v1386 = vunpack.c.h.b16 %v494
    %v1387 = vunpack.c.l.b16 %v495
    %v1388 = vunpack.c.h.b16 %v495
    %v1389 = vunpack.c.l.b16 %v496
    %v1390 = vunpack.c.h.b16 %v496
    %v1391 = vunpack.c.l.b16 %v497
    %v1392 = vunpack.c.h.b16 %v497
    %v1393 = vunpack.c.l.b16 %v498
    %v1394 = vunpack.c.h.b16 %v498
    %v1395 = vunpack.c.l.b16 %v499
    %v1396 = vunpack.c.h.b16 %v499
    %v1397 = vunpack.c.l.b16 %v500
    %v1398 = vunpack.c.h.b16 %v500
    %v1399 = vunpack.c.l.b16 %v501
    %v1400 = vunpack.c.h.b16 %v501
    %v1401 = vunpack.c.l.b16 %v502
    %v1402 = vunpack.c.h.b16 %v502
    %v1403 = vunpack.c.l.b16 %v503
    %v1404 = vunpack.c.h.b16 %v503
    %v1405 = vunpack.c.l.b16 %v504
    %v1406 = vunpack.c.h.b16 %v504
    %v1407 = vunpack.c.l.b16 %v505
    %v1408 = vunpack.c.h.b16 %v505
    %v1409 = vunpack.c.l.b16 %v506
    %v1410 = vunpack.c.h.b16 %v506
    %v1411 = vunpack.c.l.b16 %v507
    %v1412 = vunpack.c.h.b16 %v507
    %v1413 = vunpack.c.l.b16 %v508
    %v1414 = vunpack.c.h.b16 %v508
    %v1415 = vunpack.c.l.b16 %v509
    %v1416 = vunpack.c.h.b16 %v509
    %v1417 = vunpack.c.l.b16 %v510
    %v1418 = vunpack.c.h.b16 %v510
    %v1419 = vunpack.c.l.b16 %v511
    %v1420 = vunpack.c.h.b16 %v511
    %v1421 = vunpack.c.l.b16 %v512
    %v1422 = vunpack.c.h.b16 %v512
    %v1423 = vunpack.c.l.b16 %v513
    %v1424 = vunpack.c.h.b16 %v513
    %v1425 = vunpack.c.l.b16 %v514
    %v1426 = vunpack.c.h.b16 %v514
    %v1427 = vunpack.c.l.b16 %v515
    %v1428 = vunpack.c.h.b16 %v515
    %v1429 = vunpack.c.l.b16 %v516
    %v1430 = vunpack.c.h.b16 %v516
    %v1431 = vunpack.c.l.b16 %v517
    %v1432 = vunpack.c.h.b16 %v517
    %v1433 = vunpack.c.l.b16 %v518
    %v1434 = vunpack.c.h.b16 %v518
    %v1435 = vunpack.c.l.b16 %v519
    %v1436 = vunpack.c.h.b16 %v519
    %v1437 = vunpack.c.l.b16 %v520
    %v1438 = vunpack.c.h.b16 %v520
    %v1439 = vunpack.c.l.b16 %v521
    %v1440 = vunpack.c.h.b16 %v521
    %v1441 = vunpack.c.l.b16 %v522
    %v1442 = vunpack.c.h.b16 %v522
    %v1443 = vunpack.c.l.b16 %v523
    %v1444 = vunpack.c.h.b16 %v523
    %v1445 = vunpack.c.l.b16 %v524
    %v1446 = vunpack.c.h.b16 %v524
    %v1447 = vunpack.c.l.b16 %v525
    %v1448 = vunpack.c.h.b16 %v525
    %v1449 = vunpack.c.l.b16 %v526
    %v1450 = vunpack.c.h.b16 %v526
    %v1451 = vunpack.c.l.b16 %v527
    %v1452 = vunpack.c.h.b16 %v527
    %v1453 = vunpack.c.l.b16 %v528
    %v1454 = vunpack.c.h.b16 %v528
    %v1455 = vunpack.c.l.b16 %v529
    %v1456 = vunpack.c.h.b16 %v529
    %v1457 = vunpack.c.l.b16 %v530
    %v1458 = vunpack.c.h.b16 %v530
    %v1459 = vunpack.c.l.b16 %v531
    %v1460 = vunpack.c.h.b16 %v531
    %v1461 = vunpack.c.l.b16 %v532
    %v1462 = vunpack.c.h.b16 %v532
    %v1463 = vunpack.c.l.b16 %v533
    %v1464 = vunpack.c.h.b16 %v533
    %v1465 = vunpack.c.l.b16 %v534
    %v1466 = vunpack.c.h.b16 %v534
    %v1467 = vunpack.c.l.b16 %v535
    %v1468 = vunpack.c.h.b16 %v535
    %v1469 = vunpack.c.l.b16 %v536
    %v1470 = vunpack.c.h.b16 %v536
    %v1471 = vunpack.c.l.b16 %v537
    %v1472 = vunpack.c.h.b16 %v537
    %v1473 = vunpack.c.l.b16 %v538
    %v1474 = vunpack.c.h.b16 %v538
    %v1475 = vunpack.c.l.b16 %v539
    %v1476 = vunpack.c.h.b16 %v539
    %v1477 = vunpack.c.l.b16 %v540
    %v1478 = vunpack.c.h.b16 %v540
    %v1479 = vunpack.c.l.b16 %v541
    %v1480 = vunpack.c.h.b16 %v541
    %v1481 = vunpack.c.l.b16 %v542
    %v1482 = vunpack.c.h.b16 %v542
    %v1483 = vunpack.c.l.b16 %v543
    %v1484 = vunpack.c.h.b16 %v543
    %v1485 = vunpack.c.l.b16 %v544
    %v1486 = vunpack.c.h.b16 %v544
    %v1487 = vunpack.c.l.b16 %v545
    %v1488 = vunpack.c.h.b16 %v545
    %v1489 = vunpack.c.l.b16 %v546
    %v1490 = vunpack.c.h.b16 %v546
    %v1491 = vunpack.c.l.b16 %v547
    %v1492 = vunpack.c.h.b16 %v547
    %v1493 = vunpack.c.l.b16 %v548
    %v1494 = vunpack.c.h.b16 %v548
    %v1495 = vunpack.c.l.b16 %v549
    %v1496 = vunpack.c.h.b16 %v549
    %v1497 = vunpack.c.l.b16 %v550
    %v1498 = vunpack.c.h.b16 %v550
    %v1499 = vunpack.c.l.b16 %v551
    %v1500 = vunpack.c.h.b16 %v551
    %v1501 = vunpack.c.l.b16 %v552
    %v1502 = vunpack.c.h.b16 %v552
    %v1503 = vunpack.c.l.b16 %v553
    %v1504 = vunpack.c.h.b16 %v553
    %v1505 = vunpack.c.l.b16 %v554
    %v1506 = vunpack.c.h.b16 %v554
    %v1507 = vunpack.c.l.b16 %v555
    %v1508 = vunpack.c.h.b16 %v555
    %v1509 = vunpack.c.l.b16 %v556
    %v1510 = vunpack.c.h.b16 %v556
    %v1511 = vunpack.c.l.b16 %v557
    %v1512 = vunpack.c.h.b16 %v557
    %v1513 = vunpack.c.l.b16 %v558
    %v1514 = vunpack.c.h.b16 %v558
    %v1515 = vunpack.c.l.b16 %v559
    %v1516 = vunpack.c.h.b16 %v559
    %v1517 = vunpack.c.l.b16 %v560
    %v1518 = vunpack.c.h.b16 %v560
    %v1519 = vunpack.c.l.b16 %v561
    %v1520 = vunpack.c.h.b16 %v561
    %v1521 = vunpack.c.l.b16 %v562
    %v1522 = vunpack.c.h.b16 %v562
    %v1523 = vunpack.c.l.b16 %v563
    %v1524 = vunpack.c.h.b16 %v563
    %v1525 = vunpack.c.l.b16 %v564
    %v1526 = vunpack.c.h.b16 %v564
    %v1527 = vunpack.c.l.b16 %v565
    %v1528 = vunpack.c.h.b16 %v565
    %v1529 = vunpack.c.l.b16 %v566
    %v1530 = vunpack.c.h.b16 %v566
    %v1531 = vunpack.c.l.b16 %v567
    %v1532 = vunpack.c.h.b16 %v567
    %v1533 = vunpack.c.l.b16 %v568
    %v1534 = vunpack.c.h.b16 %v568
    %v1535 = vunpack.c.l.b16 %v569
    %v1536 = vunpack.c.h.b16 %v569
    %v1537 = vunpack.c.l.b16 %v570
    %v1538 = vunpack.c.h.b16 %v570
    %v1539 = vunpack.c.l.b16 %v571
    %v1540 = vunpack.c.h.b16 %v571
    %v1541 = vunpack.c.l.b16 %v572
    %v1542 = vunpack.c.h.b16 %v572
    %v1543 = vunpack.c.l.b16 %v573
    %v1544 = vunpack.c.h.b16 %v573
    %v1545 = vunpack.c.l.b16 %v574
    %v1546 = vunpack.c.h.b16 %v574
    %v1547 = vunpack.c.l.b16 %v575
    %v1548 = vunpack.c.h.b16 %v575
    %v1549 = vunpack.c.l.b16 %v576
    %v1550 = vunpack.c.h.b16 %v576
    %v1551 = vunpack.c.l.b16 %v577
    %v1552 = vunpack.c.h.b16 %v577
    %v1553 = vunpack.c.l.b16 %v578
    %v1554 = vunpack.c.h.b16 %v578
    %v1555 = vunpack.c.l.b16 %v579
    %v1556 = vunpack.c.h.b16 %v579
    %v1557 = vunpack.c.l.b16 %v580
    %v1558 = vunpack.c.h.b16 %v580
    %v1559 = vunpack.c.l.b16 %v581
    %v1560 = vunpack.c.h.b16 %v581
    %v1561 = vunpack.c.l.b16 %v582
    %v1562 = vunpack.c.h.b16 %v582
    %v1563 = vunpack.c.l.b16 %v583
    %v1564 = vunpack.c.h.b16 %v583
    %v1565 = vunpack.c.l.b16 %v584
    %v1566 = vunpack.c.h.b16 %v584
    %v1567 = vunpack.c.l.b16 %v585
    %v1568 = vunpack.c.h.b16 %v585
    %v1569 = vunpack.c.l.b16 %v586
    %v1570 = vunpack.c.h.b16 %v586
    %v1571 = vunpack.c.l.b16 %v587
    %v1572 = vunpack.c.h.b16 %v587
    %v1573 = vunpack.c.l.b16 %v588
    %v1574 = vunpack.c.h.b16 %v588
    %v1575 = vunpack.c.l.b16 %v589
    %v1576 = vunpack.c.h.b16 %v589
    %v1577 = vunpack.c.l.b16 %v590
    %v1578 = vunpack.c.h.b16 %v590
    %v1579 = vunpack.c.l.b16 %v591
    %v1580 = vunpack.c.h.b16 %v591
    %v1581 = vunpack.c.l.b16 %v592
    %v1582 = vunpack.c.h.b16 %v592
    %v1583 = vunpack.c.l.b16 %v593
    %v1584 = vunpack.c.h.b16 %v593
    %v1585 = vunpack.c.l.b16 %v594
    %v1586 = vunpack.c.h.b16 %v594
    %v1587 = vunpack.c.l.b16 %v595
    %v1588 = vunpack.c.h.b16 %v595
    %v1589 = vunpack.c.l.b16 %v596
    %v1590 = vunpack.c.h.b16 %v596
    %v1591 = vunpack.c.l.b16 %v597
    %v1592 = vunpack.c.h.b16 %v597
    %v1593 = vunpack.c.l.b16 %v598
    %v1594 = vunpack.c.h.b16 %v598
    %v1595 = vunpack.c.l.b16 %v599
    %v1596 = vunpack.c.h.b16 %v599
    %v1597 = vunpack.c.l.b16 %v600
    %v1598 = vunpack.c.h.b16 %v600
    %v1599 = vunpack.c.l.b16 %v601
    %v1600 = vunpack.c.h.b16 %v601
    %v1601 = vunpack.c.l.b16 %v602
    %v1602 = vunpack.c.h.b16 %v602
    %v1603 = vunpack.c.l.b16 %v603
    %v1604 = vunpack.c.h.b16 %v603
    %v1605 = vunpack.c.l.b16 %v604
    %v1606 = vunpack.c.h.b16 %v604
    %v1607 = vunpack.c.l.b16 %v605
    %v1608 = vunpack.c.h.b16 %v605
    %v1609 = vunpack.c.l.b16 %v606
    %v1610 = vunpack.c.h.b16 %v606
    %v1611 = vunpack.c.l.b16 %v607
    %v1612 = vunpack.c.h.b16 %v607
    %v1613 = vunpack.c.l.b16 %v608
    %v1614 = vunpack.c.h.b16 %v608
    %v1615 = vunpack.c.l.b16 %v609
    %v1616 = vunpack.c.h.b16 %v609
    %v1617 = vunpack.c.l.b16 %v610
    %v1618 = vunpack.c.h.b16 %v610
    %v1619 = vunpack.c.l.b16 %v611
    %v1620 = vunpack.c.h.b16 %v611
    %v1621 = vunpack.c.l.b16 %v612
    %v1622 = vunpack.c.h.b16 %v612
    %v1623 = vunpack.c.l.b16 %v613
    %v1624 = vunpack.c.h.b16 %v613
    %v1625 = vunpack.c.l.b16 %v614
    %v1626 = vunpack.c.h.b16 %v614
    %v1627 = vunpack.c.l.b16 %v615
    %v1628 = vunpack.c.h.b16 %v615
    %v1629 = vunpack.c.l.b16 %v616
    %v1630 = vunpack.c.h.b16 %v616
    %v1631 = vunpack.c.l.b16 %v617
    %v1632 = vunpack.c.h.b16 %v617
    %v1633 = vunpack.c.l.b16 %v618
    %v1634 = vunpack.c.h.b16 %v618
    %v1635 = vunpack.c.l.b16 %v619
    %v1636 = vunpack.c.h.b16 %v619
    %v1637 = vunpack.c.l.b16 %v620
    %v1638 = vunpack.c.h.b16 %v620
    %v1639 = vunpack.c.l.b16 %v621
    %v1640 = vunpack.c.h.b16 %v621
    %v1641 = vunpack.c.l.b16 %v622
    %v1642 = vunpack.c.h.b16 %v622
    %v1643 = vunpack.c.l.b16 %v623
    %v1644 = vunpack.c.h.b16 %v623
    %v1645 = vunpack.c.l.b16 %v624
    %v1646 = vunpack.c.h.b16 %v624
    %v1647 = vunpack.c.l.b16 %v625
    %v1648 = vunpack.c.h.b16 %v625
    %v1649 = vunpack.c.l.b16 %v626
    %v1650 = vunpack.c.h.b16 %v626
    %v1651 = vunpack.c.l.b16 %v627
    %v1652 = vunpack.c.h.b16 %v627
    %v1653 = vunpack.c.l.b16 %v628
    %v1654 = vunpack.c.h.b16 %v628
    %v1655 = vunpack.c.l.b16 %v629
    %v1656 = vunpack.c.h.b16 %v629
    %v1657 = vunpack.c.l.b16 %v630
    %v1658 = vunpack.c.h.b16 %v630
    %v1659 = vunpack.c.l.b16 %v631
    %v1660 = vunpack.c.h.b16 %v631
    %v1661 = vunpack.c.l.b16 %v632
    %v1662 = vunpack.c.h.b16 %v632
    %v1663 = vunpack.c.l.b16 %v633
    %v1664 = vunpack.c.h.b16 %v633
    %v1665 = vunpack.c.l.b16 %v634
    %v1666 = vunpack.c.h.b16 %v634
    %v1667 = vunpack.c.l.b16 %v635
    %v1668 = vunpack.c.h.b16 %v635
    %v1669 = vunpack.c.l.b16 %v636
    %v1670 = vunpack.c.h.b16 %v636
    %v1671 = vunpack.c.l.b16 %v637
    %v1672 = vunpack.c.h.b16 %v637
    %v1673 = vunpack.c.l.b16 %v638
    %v1674 = vunpack.c.h.b16 %v638
    %v1675 = vunpack.c.l.b16 %v639
    %v1676 = vunpack.c.h.b16 %v639
    %v1677 = vunpack.c.l.b16 %v640
    %v1678 = vunpack.c.h.b16 %v640
    %v1679 = vunpack.c.l.b16 %v641
    %v1680 = vunpack.c.h.b16 %v641
    %v1681 = vunpack.c.l.b16 %v642
    %v1682 = vunpack.c.h.b16 %v642
    %v1683 = vunpack.c.l.b16 %v643
    %v1684 = vunpack.c.h.b16 %v643
    %v1685 = vunpack.c.l.b16 %v644
    %v1686 = vunpack.c.h.b16 %v644
    %v1687 = vunpack.c.l.b16 %v645
    %v1688 = vunpack.c.h.b16 %v645
    %v1689 = vunpack.c.l.b16 %v646
    %v1690 = vunpack.c.h.b16 %v646
    %v1691 = vunpack.c.l.b16 %v647
    %v1692 = vunpack.c.h.b16 %v647
    %v1693 = vunpack.c.l.b16 %v648
    %v1694 = vunpack.c.h.b16 %v648
    %v1695 = vunpack.c.l.b16 %v649
    %v1696 = vunpack.c.h.b16 %v649
    %v1697 = vunpack.c.l.b16 %v650
    %v1698 = vunpack.c.h.b16 %v650
    %v1699 = vunpack.c.l.b16 %v651
    %v1700 = vunpack.c.h.b16 %v651
    %v1701 = vunpack.c.l.b16 %v652
    %v1702 = vunpack.c.h.b16 %v652
    %v1703 = vunpack.c.l.b16 %v653
    %v1704 = vunpack.c.h.b16 %v653
    %v1705 = vunpack.c.l.b16 %v654
    %v1706 = vunpack.c.h.b16 %v654
    %v1707 = vunpack.c.l.b16 %v655
    %v1708 = vunpack.c.h.b16 %v655
    %v1709 = vunpack.c.l.b16 %v656
    %v1710 = vunpack.c.h.b16 %v656
    %v1711 = vunpack.c.l.b16 %v657
    %v1712 = vunpack.c.h.b16 %v657
    %v1713 = vunpack.c.l.b16 %v658
    %v1714 = vunpack.c.h.b16 %v658
    %v1715 = vunpack.c.l.b16 %v659
    %v1716 = vunpack.c.h.b16 %v659
    %v1717 = vunpack.c.l.b16 %v660
    %v1718 = vunpack.c.h.b16 %v660
    %v1719 = vunpack.c.l.b16 %v661
    %v1720 = vunpack.c.h.b16 %v661
    %v1721 = vunpack.c.l.b16 %v662
    %v1722 = vunpack.c.h.b16 %v662
    %v1723 = vunpack.c.l.b16 %v663
    %v1724 = vunpack.c.h.b16 %v663
    %v1725 = vunpack.c.l.b16 %v664
    %v1726 = vunpack.c.h.b16 %v664
    %v1727 = vunpack.c.l.b16 %v665
    %v1728 = vunpack.c.h.b16 %v665
    %v1729 = vunpack.c.l.b16 %v666
    %v1730 = vunpack.c.h.b16 %v666
    %v1731 = vunpack.c.l.b16 %v667
    %v1732 = vunpack.c.h.b16 %v667
    %v1733 = vunpack.c.l.b16 %v668
    %v1734 = vunpack.c.h.b16 %v668
    %v1735 = vunpack.c.l.b16 %v669
    %v1736 = vunpack.c.h.b16 %v669
    %v1737 = vunpack.c.l.b16 %v670
    %v1738 = vunpack.c.h.b16 %v670
    %v1739 = vunpack.c.l.b16 %v671
    %v1740 = vunpack.c.h.b16 %v671
    %v1741 = vunpack.c.l.b16 %v672
    %v1742 = vunpack.c.h.b16 %v672
    %v1743 = vunpack.c.l.b16 %v673
    %v1744 = vunpack.c.h.b16 %v673
    %v1745 = vunpack.c.l.b16 %v674
    %v1746 = vunpack.c.h.b16 %v674
    %v1747 = vunpack.c.l.b16 %v675
    %v1748 = vunpack.c.h.b16 %v675
    %v1749 = vunpack.c.l.b16 %v676
    %v1750 = vunpack.c.h.b16 %v676
    %v1751 = vunpack.c.l.b16 %v677
    %v1752 = vunpack.c.h.b16 %v677
    %v1753 = vunpack.c.l.b16 %v678
    %v1754 = vunpack.c.h.b16 %v678
    %v1755 = vunpack.c.l.b16 %v679
    %v1756 = vunpack.c.h.b16 %v679
    %v1757 = vunpack.c.l.b16 %v680
    %v1758 = vunpack.c.h.b16 %v680
    %v1759 = vunpack.c.l.b16 %v681
    %v1760 = vunpack.c.h.b16 %v681
    %v1761 = vunpack.c.l.b16 %v682
    %v1762 = vunpack.c.h.b16 %v682
    %v1763 = vunpack.c.l.b16 %v683
    %v1764 = vunpack.c.h.b16 %v683
    %v1765 = vunpack.c.l.b16 %v684
    %v1766 = vunpack.c.h.b16 %v684
    %v1767 = vunpack.c.l.b16 %v685
    %v1768 = vunpack.c.h.b16 %v685
    %v1769 = vunpack.c.l.b16 %v686
    %v1770 = vunpack.c.h.b16 %v686
    %v1771 = vunpack.c.l.b16 %v687
    %v1772 = vunpack.c.h.b16 %v687
    %v1773 = vunpack.c.l.b16 %v688
    %v1774 = vunpack.c.h.b16 %v688
    %v1775 = vunpack.c.l.b16 %v689
    %v1776 = vunpack.c.h.b16 %v689
    %v1777 = vunpack.c.l.b16 %v690
    %v1778 = vunpack.c.h.b16 %v690
    %v1779 = vunpack.c.l.b16 %v691
    %v1780 = vunpack.c.h.b16 %v691
    %v1781 = vunpack.c.l.b16 %v692
    %v1782 = vunpack.c.h.b16 %v692
    %v1783 = vunpack.c.l.b16 %v693
    %v1784 = vunpack.c.h.b16 %v693
    %v1785 = vunpack.c.l.b16 %v694
    %v1786 = vunpack.c.h.b16 %v694
    %v1787 = vunpack.c.l.b16 %v695
    %v1788 = vunpack.c.h.b16 %v695
    %v1789 = vunpack.c.l.b16 %v696
    %v1790 = vunpack.c.h.b16 %v696
    %v1791 = vunpack.c.l.b16 %v697
    %v1792 = vunpack.c.h.b16 %v697
    %v1793 = vunpack.c.l.b16 %v698
    %v1794 = vunpack.c.h.b16 %v698
    %v1795 = vunpack.c.l.b16 %v699
    %v1796 = vunpack.c.h.b16 %v699
    %v1797 = vunpack.c.l.b16 %v700
    %v1798 = vunpack.c.h.b16 %v700
    %v1799 = vunpack.c.l.b16 %v701
    %v1800 = vunpack.c.h.b16 %v701
    %v1801 = vunpack.c.l.b16 %v702
    %v1802 = vunpack.c.h.b16 %v702
    %v1803 = vunpack.c.l.b16 %v703
    %v1804 = vunpack.c.h.b16 %v703
    %v1805 = vunpack.c.l.b16 %v704
    %v1806 = vunpack.c.h.b16 %v704
    %v1807 = vunpack.c.l.b16 %v705
    %v1808 = vunpack.c.h.b16 %v705
    %v1809 = vunpack.c.l.b16 %v706
    %v1810 = vunpack.c.h.b16 %v706
    %v1811 = vunpack.c.l.b16 %v707
    %v1812 = vunpack.c.h.b16 %v707
    %v1813 = vunpack.c.l.b16 %v708
    %v1814 = vunpack.c.h.b16 %v708
    %v1815 = vunpack.c.l.b16 %v709
    %v1816 = vunpack.c.h.b16 %v709
    %v1817 = vunpack.c.l.b16 %v710
    %v1818 = vunpack.c.h.b16 %v710
    %v1819 = vunpack.c.l.b16 %v711
    %v1820 = vunpack.c.h.b16 %v711
    %v1821 = vunpack.c.l.b16 %v712
    %v1822 = vunpack.c.h.b16 %v712
    %v1823 = vunpack.c.l.b16 %v713
    %v1824 = vunpack.c.h.b16 %v713
    %v1825 = vunpack.c.l.b16 %v714
    %v1826 = vunpack.c.h.b16 %v714
    %v1827 = vunpack.c.l.b16 %v715
    %v1828 = vunpack.c.h.b16 %v715
    %v1829 = vunpack.c.l.b16 %v716
    %v1830 = vunpack.c.h.b16 %v716
    %v1831 = vunpack.c.l.b16 %v717
    %v1832 = vunpack.c.h.b16 %v717
    %v1833 = vunpack.c.l.b16 %v718
    %v1834 = vunpack.c.h.b16 %v718
    %v1835 = vunpack.c.l.b16 %v719
    %v1836 = vunpack.c.h.b16 %v719
    %v1837 = vunpack.c.l.b16 %v720
    %v1838 = vunpack.c.h.b16 %v720
    %v1839 = vunpack.c.l.b16 %v721
    %v1840 = vunpack.c.h.b16 %v721
    %v1841 = vunpack.c.l.b16 %v722
    %v1842 = vunpack.c.h.b16 %v722
    %v1843 = vunpack.c.l.b16 %v723
    %v1844 = vunpack.c.h.b16 %v723
    %v1845 = vunpack.c.l.b16 %v724
    %v1846 = vunpack.c.h.b16 %v724
    %v1847 = vunpack.c.l.b16 %v725
    %v1848 = vunpack.c.h.b16 %v725
    %v1849 = vunpack.c.l.b16 %v726
    %v1850 = vunpack.c.h.b16 %v726
    %v1851 = vunpack.c.l.b16 %v727
    %v1852 = vunpack.c.h.b16 %v727
    %v1853 = vunpack.c.l.b16 %v728
    %v1854 = vunpack.c.h.b16 %v728
    %v1855 = vunpack.c.l.b16 %v729
    %v1856 = vunpack.c.h.b16 %v729
    %v1857 = vunpack.c.l.b16 %v730
    %v1858 = vunpack.c.h.b16 %v730
    %v1859 = vunpack.c.l.b16 %v731
    %v1860 = vunpack.c.h.b16 %v731
    %v1861 = vunpack.c.l.b16 %v732
    %v1862 = vunpack.c.h.b16 %v732
    %v1863 = vunpack.c.l.b16 %v733
    %v1864 = vunpack.c.h.b16 %v733
    %v1865 = vunpack.c.l.b16 %v734
    %v1866 = vunpack.c.h.b16 %v734
    %v1867 = vunpack.c.l.b16 %v735
    %v1868 = vunpack.c.h.b16 %v735
    %v1869 = vunpack.c.l.b16 %v736
    %v1870 = vunpack.c.h.b16 %v736
    %v1871 = vunpack.c.l.b16 %v737
    %v1872 = vunpack.c.h.b16 %v737
    %v1873 = vunpack.c.l.b16 %v738
    %v1874 = vunpack.c.h.b16 %v738
    %v1875 = vunpack.c.l.b16 %v739
    %v1876 = vunpack.c.h.b16 %v739
    %v1877 = vunpack.c.l.b16 %v740
    %v1878 = vunpack.c.h.b16 %v740
    %v1879 = vunpack.c.l.b16 %v741
    %v1880 = vunpack.c.h.b16 %v741
    %v1881 = vunpack.c.l.b16 %v742
    %v1882 = vunpack.c.h.b16 %v742
    %v1883 = vunpack.c.l.b16 %v743
    %v1884 = vunpack.c.h.b16 %v743
    %v1885 = vunpack.c.l.b16 %v744
    %v1886 = vunpack.c.h.b16 %v744
    %v1887 = vunpack.c.l.b16 %v745
    %v1888 = vunpack.c.h.b16 %v745
    %v1889 = vunpack.c.l.b16 %v746
    %v1890 = vunpack.c.h.b16 %v746
    %v1891 = vunpack.c.l.b16 %v747
    %v1892 = vunpack.c.h.b16 %v747
    %v1893 = vunpack.c.l.b16 %v748
    %v1894 = vunpack.c.h.b16 %v748
    %v1895 = vunpack.c.l.b16 %v749
    %v1896 = vunpack.c.h.b16 %v749
    %v1897 = vunpack.c.l.b16 %v750
    %v1898 = vunpack.c.h.b16 %v750
    %v1899 = vunpack.c.l.b16 %v751
    %v1900 = vunpack.c.h.b16 %v751
    %v1901 = vunpack.c.l.b16 %v752
    %v1902 = vunpack.c.h.b16 %v752
    %v1903 = vunpack.c.l.b16 %v753
    %v1904 = vunpack.c.h.b16 %v753
    %v1905 = vunpack.c.l.b16 %v754
    %v1906 = vunpack.c.h.b16 %v754
    %v1907 = vunpack.c.l.b16 %v755
    %v1908 = vunpack.c.h.b16 %v755
    %v1909 = vunpack.c.l.b16 %v756
    %v1910 = vunpack.c.h.b16 %v756
    %v1911 = vunpack.c.l.b16 %v757
    %v1912 = vunpack.c.h.b16 %v757
    %v1913 = vunpack.c.l.b16 %v758
    %v1914 = vunpack.c.h.b16 %v758
    %v1915 = vunpack.c.l.b16 %v759
    %v1916 = vunpack.c.h.b16 %v759
    %v1917 = vunpack.c.l.b16 %v760
    %v1918 = vunpack.c.h.b16 %v760
    %v1919 = vunpack.c.l.b16 %v761
    %v1920 = vunpack.c.h.b16 %v761
    %v1921 = vunpack.c.l.b16 %v762
    %v1922 = vunpack.c.h.b16 %v762
    %v1923 = vunpack.c.l.b16 %v763
    %v1924 = vunpack.c.h.b16 %v763
    %v1925 = vunpack.c.l.b16 %v764
    %v1926 = vunpack.c.h.b16 %v764
    %v1927 = vunpack.c.l.b16 %v765
    %v1928 = vunpack.c.h.b16 %v765
    %v1929 = vunpack.c.l.b16 %v766
    %v1930 = vunpack.c.h.b16 %v766
    %v1931 = vpack.c.b16 %v1165, %v1163
    %v1932 = vpack.c.b16 %v1166, %v1164
    %v1933 = vpack.c.b16 %v1169, %v1167
    %v1934 = vpack.c.b16 %v1170, %v1168
    %v1935 = vpack.c.b16 %v1173, %v1171
    %v1936 = vpack.c.b16 %v1174, %v1172
    %v1937 = vpack.c.b16 %v1177, %v1175
    %v1938 = vpack.c.b16 %v1178, %v1176
    %v1939 = vpack.c.b16 %v1181, %v1179
    %v1940 = vpack.c.b16 %v1182, %v1180
    %v1941 = vpack.c.b16 %v1185, %v1183
    %v1942 = vpack.c.b16 %v1186, %v1184
    %v1943 = vpack.c.b16 %v1189, %v1187
    %v1944 = vpack.c.b16 %v1190, %v1188
    %v1945 = vpack.c.b16 %v1193, %v1191
    %v1946 = vpack.c.b16 %v1194, %v1192
    %v1947 = vpack.c.b16 %v1197, %v1195
    %v1948 = vpack.c.b16 %v1198, %v1196
    %v1949 = vpack.c.b16 %v1201, %v1199
    %v1950 = vpack.c.b16 %v1202, %v1200
    %v1951 = vpack.c.b16 %v1205, %v1203
    %v1952 = vpack.c.b16 %v1206, %v1204
    %v1953 = vpack.c.b16 %v1209, %v1207
    %v1954 = vpack.c.b16 %v1210, %v1208
    %v1955 = vpack.c.b16 %v1213, %v1211
    %v1956 = vpack.c.b16 %v1214, %v1212
    %v1957 = vpack.c.b16 %v1217, %v1215
    %v1958 = vpack.c.b16 %v1218, %v1216
    %v1959 = vpack.c.b16 %v1221, %v1219
    %v1960 = vpack.c.b16 %v1222, %v1220
    %v1961 = vpack.c.b16 %v1225, %v1223
    %v1962 = vpack.c.b16 %v1226, %v1224
    %v1963 = vpack.c.b16 %v1229, %v1227
    %v1964 = vpack.c.b16 %v1230, %v1228
    %v1965 = vpack.c.b16 %v1233, %v1231
    %v1966 = vpack.c.b16 %v1234, %v1232
    %v1967 = vpack.c.b16 %v1237, %v1235
    %v1968 = vpack.c.b16 %v1238, %v1236
    %v1969 = vpack.c.b16 %v1241, %v1239
    %v1970 = vpack.c.b16 %v1242, %v1240
    %v1971 = vpack.c.b16 %v1245, %v1243
    %v1972 = vpack.c.b16 %v1246, %v1244
    %v1973 = vpack.c.b16 %v1249, %v1247
    %v1974 = vpack.c.b16 %v1250, %v1248
    %v1975 = vpack.c.b16 %v1253, %v1251
    %v1976 = vpack.c.b16 %v1254, %v1252
    %v1977 = vpack.c.b16 %v1257, %v1255
    %v1978 = vpack.c.b16 %v1258, %v1256
    %v1979 = vpack.c.b16 %v1261, %v1259
    %v1980 = vpack.c.b16 %v1262, %v1260
    %v1981 = vpack.c.b16 %v1265, %v1263
    %v1982 = vpack.c.b16 %v1266, %v1264
    %v1983 = vpack.c.b16 %v1269, %v1267
    %v1984 = vpack.c.b16 %v1270, %v1268
    %v1985 = vpack.c.b16 %v1273, %v1271
    %v1986 = vpack.c.b16 %v1274, %v1272
    %v1987 = vpack.c.b16 %v1277, %v1275
    %v1988 = vpack.c.b16 %v1278, %v1276
    %v1989 = vpack.c.b16 %v1281, %v1279
    %v1990 = vpack.c.b16 %v1282, %v1280
    %v1991 = vpack.c.b16 %v1285, %v1283
    %v1992 = vpack.c.b16 %v1286, %v1284
    %v1993 = vpack.c.b16 %v1289, %v1287
    %v1994 = vpack.c.b16 %v1290, %v1288
    %v1995 = vpack.c.b16 %v1293, %v1291
    %v1996 = vpack.c.b16 %v1294, %v1292
    %v1997 = vpack.c.b16 %v1297, %v1295
    %v1998 = vpack.c.b16 %v1298, %v1296
    %v1999 = vpack.c.b16 %v1301, %v1299
    %v2000 = vpack.c.b16 %v1302, %v1300
    %v2001 = vpack.c.b16 %v1305, %v1303
    %v2002 = vpack.c.b16 %v1306, %v1304
    %v2003 = vpack.c.b16 %v1309, %v1307
    %v2004 = vpack.c.b16 %v1310, %v1308
    %v2005 = vpack.c.b16 %v1313, %v1311
    %v2006 = vpack.c.b16 %v1314, %v1312
    %v2007 = vpack.c.b16 %v1317, %v1315
    %v2008 = vpack.c.b16 %v1318, %v1316
    %v2009 = vpack.c.b16 %v1321, %v1319
    %v2010 = vpack.c.b16 %v1322, %v1320
    %v2011 = vpack.c.b16 %v1325, %v1323
    %v2012 = vpack.c.b16 %v1326, %v1324
    %v2013 = vpack.c.b16 %v1329, %v1327
    %v2014 = vpack.c.b16 %v1330, %v1328
    %v2015 = vpack.c.b16 %v1333, %v1331
    %v2016 = vpack.c.b16 %v1334, %v1332
    %v2017 = vpack.c.b16 %v1337, %v1335
    %v2018 = vpack.c.b16 %v1338, %v1336
    %v2019 = vpack.c.b16 %v1341, %v1339
    %v2020 = vpack.c.b16 %v1342, %v1340
    %v2021 = vpack.c.b16 %v1345, %v1343
    %v2022 = vpack.c.b16 %v1346, %v1344
    %v2023 = vpack.c.b16 %v1349, %v1347
    %v2024 = vpack.c.b16 %v1350, %v1348
    %v2025 = vpack.c.b16 %v1353, %v1351
    %v2026 = vpack.c.b16 %v1354, %v1352
    %v2027 = vpack.c.b16 %v1357, %v1355
    %v2028 = vpack.c.b16 %v1358, %v1356
    %v2029 = vpack.c.b16 %v1361, %v1359
    %v2030 = vpack.c.b16 %v1362, %v1360
    %v2031 = vpack.c.b16 %v1365, %v1363
    %v2032 = vpack.c.b16 %v1366, %v1364
    %v2033 = vpack.c.b16 %v1369, %v1367
    %v2034 = vpack.c.b16 %v1370, %v1368
    %v2035 = vpack.c.b16 %v1373, %v1371
    %v2036 = vpack.c.b16 %v1374, %v1372
    %v2037 = vpack.c.b16 %v1377, %v1375
    %v2038 = vpack.c.b16 %v1378, %v1376
    %v2039 = vpack.c.b16 %v1381, %v1379
    %v2040 = vpack.c.b16 %v1382, %v1380
    %v2041 = vpack.c.b16 %v1385, %v1383
    %v2042 = vpack.c.b16 %v1386, %v1384
    %v2043 = vpack.c.b16 %v1389, %v1387
    %v2044 = vpack.c.b16 %v1390, %v1388
    %v2045 = vpack.c.b16 %v1393, %v1391
    %v2046 = vpack.c.b16 %v1394, %v1392
    %v2047 = vpack.c.b16 %v1397, %v1395
    %v2048 = vpack.c.b16 %v1398, %v1396
    %v2049 = vpack.c.b16 %v1401, %v1399
    %v2050 = vpack.c.b16 %v1402, %v1400
    %v2051 = vpack.c.b16 %v1405, %v1403
    %v2052 = vpack.c.b16 %v1406, %v1404
    %v2053 = vpack.c.b16 %v1409, %v1407
    %v2054 = vpack.c.b16 %v1410, %v1408
    %v2055 = vpack.c.b16 %v1413, %v1411
    %v2056 = vpack.c.b16 %v1414, %v1412
    %v2057 = vpack.c.b16 %v1417, %v1415
    %v2058 = vpack.c.b16 %v1418, %v1416
    %v2059 = vpack.c.b16 %v1421, %v1419
    %v2060 = vpack.c.b16 %v1422, %v1420
    %v2061 = vpack.c.b16 %v1425, %v1423
    %v2062 = vpack.c.b16 %v1426, %v1424
    %v2063 = vpack.c.b16 %v1429, %v1427
    %v2064 = vpack.c.b16 %v1430, %v1428
    %v2065 = vpack.c.b16 %v1433, %v1431
    %v2066 = vpack.c.b16 %v1434, %v1432
    %v2067 = vpack.c.b16 %v1437, %v1435
    %v2068 = vpack.c.b16 %v1438, %v1436
    %v2069 = vpack.c.b16 %v1441, %v1439
    %v2070 = vpack.c.b16 %v1442, %v1440
    %v2071 = vpack.c.b16 %v1445, %v1443
    %v2072 = vpack.c.b16 %v1446, %v1444
    %v2073 = vpack.c.b16 %v1449, %v1447
    %v2074 = vpack.c.b16 %v1450, %v1448
    %v2075 = vpack.c.b16 %v1453, %v1451
    %v2076 = vpack.c.b16 %v1454, %v1452
    %v2077 = vpack.c.b16 %v1457, %v1455
    %v2078 = vpack.c.b16 %v1458, %v1456
    %v2079 = vpack.c.b16 %v1461, %v1459
    %v2080 = vpack.c.b16 %v1462, %v1460
    %v2081 = vpack.c.b16 %v1465, %v1463
    %v2082 = vpack.c.b16 %v1466, %v1464
    %v2083 = vpack.c.b16 %v1469, %v1467
    %v2084 = vpack.c.b16 %v1470, %v1468
    %v2085 = vpack.c.b16 %v1473, %v1471
    %v2086 = vpack.c.b16 %v1474, %v1472
    %v2087 = vpack.c.b16 %v1477, %v1475
    %v2088 = vpack.c.b16 %v1478, %v1476
    %v2089 = vpack.c.b16 %v1481, %v1479
    %v2090 = vpack.c.b16 %v1482, %v1480
    %v2091 = vpack.c.b16 %v1485, %v1483
    %v2092 = vpack.c.b16 %v1486, %v1484
    %v2093 = vpack.c.b16 %v1489, %v1487
    %v2094 = vpack.c.b16 %v1490, %v1488
    %v2095 = vpack.c.b16 %v1493, %v1491
    %v2096 = vpack.c.b16 %v1494, %v1492
    %v2097 = vpack.c.b16 %v1497, %v1495
    %v2098 = vpack.c.b16 %v1498, %v1496
    %v2099 = vpack.c.b16 %v1501, %v1499
    %v2100 = vpack.c.b16 %v1502, %v1500
    %v2101 = vpack.c.b16 %v1505, %v1503
    %v2102 = vpack.c.b16 %v1506, %v1504
    %v2103 = vpack.c.b16 %v1509, %v1507
    %v2104 = vpack.c.b16 %v1510, %v1508
    %v2105 = vpack.c.b16 %v1513, %v1511
    %v2106 = vpack.c.b16 %v1514, %v1512
    %v2107 = vpack.c.b16 %v1517, %v1515
    %v2108 = vpack.c.b16 %v1518, %v1516
    %v2109 = vpack.c.b16 %v1521, %v1519
    %v2110 = vpack.c.b16 %v1522, %v1520
    %v2111 = vpack.c.b16 %v1525, %v1523
    %v2112 = vpack.c.b16 %v1526, %v1524
    %v2113 = vpack.c.b16 %v1529, %v1527
    %v2114 = vpack.c.b16 %v1530, %v1528
    %v2115 = vpack.c.b16 %v1533, %v1531
    %v2116 = vpack.c.b16 %v1534, %v1532
    %v2117 = vpack.c.b16 %v1537, %v1535
    %v2118 = vpack.c.b16 %v1538, %v1536
    %v2119 = vpack.c.b16 %v1541, %v1539
    %v2120 = vpack.c.b16 %v1542, %v1540
    %v2121 = vpack.c.b16 %v1545, %v1543
    %v2122 = vpack.c.b16 %v1546, %v1544
    %v2123 = vpack.c.b16 %v1549, %v1547
    %v2124 = vpack.c.b16 %v1550, %v1548
    %v2125 = vpack.c.b16 %v1553, %v1551
    %v2126 = vpack.c.b16 %v1554, %v1552
    %v2127 = vpack.c.b16 %v1557, %v1555
    %v2128 = vpack.c.b16 %v1558, %v1556
    %v2129 = vpack.c.b16 %v1561, %v1559
    %v2130 = vpack.c.b16 %v1562, %v1560
    %v2131 = vpack.c.b16 %v1565, %v1563
    %v2132 = vpack.c.b16 %v1566, %v1564
    %v2133 = vpack.c.b16 %v1569, %v1567
    %v2134 = vpack.c.b16 %v1570, %v1568
    %v2135 = vpack.c.b16 %v1573, %v1571
    %v2136 = vpack.c.b16 %v1574, %v1572
    %v2137 = vpack.c.b16 %v1577, %v1575
    %v2138 = vpack.c.b16 %v1578, %v1576
    %v2139 = vpack.c.b16 %v1581, %v1579
    %v2140 = vpack.c.b16 %v1582, %v1580
    %v2141 = vpack.c.b16 %v1585, %v1583
    %v2142 = vpack.c.b16 %v1586, %v1584
    %v2143 = vpack.c.b16 %v1589, %v1587
    %v2144 = vpack.c.b16 %v1590, %v1588
    %v2145 = vpack.c.b16 %v1593, %v1591
    %v2146 = vpack.c.b16 %v1594, %v1592
    %v2147 = vpack.c.b16 %v1597, %v1595
    %v2148 = vpack.c.b16 %v1598, %v1596
    %v2149 = vpack.c.b16 %v1601, %v1599
    %v2150 = vpack.c.b16 %v1602, %v1600
    %v2151 = vpack.c.b16 %v1605, %v1603
    %v2152 = vpack.c.b16 %v1606, %v1604
    %v2153 = vpack.c.b16 %v1609, %v1607
    %v2154 = vpack.c.b16 %v1610, %v1608
    %v2155 = vpack.c.b16 %v1613, %v1611
    %v2156 = vpack.c.b16 %v1614, %v1612
    %v2157 = vpack.c.b16 %v1617, %v1615
    %v2158 = vpack.c.b16 %v1618, %v1616
    %v2159 = vpack.c.b16 %v1621, %v1619
    %v2160 = vpack.c.b16 %v1622, %v1620
    %v2161 = vpack.c.b16 %v1625, %v1623
    %v2162 = vpack.c.b16 %v1626, %v1624
    %v2163 = vpack.c.b16 %v1629, %v1627
    %v2164 = vpack.c.b16 %v1630, %v1628
    %v2165 = vpack.c.b16 %v1633, %v1631
    %v2166 = vpack.c.b16 %v1634, %v1632
    %v2167 = vpack.c.b16 %v1637, %v1635
    %v2168 = vpack.c.b16 %v1638, %v1636
    %v2169 = vpack.c.b16 %v1641, %v1639
    %v2170 = vpack.c.b16 %v1642, %v1640
    %v2171 = vpack.c.b16 %v1645, %v1643
    %v2172 = vpack.c.b16 %v1646, %v1644
    %v2173 = vpack.c.b16 %v1649, %v1647
    %v2174 = vpack.c.b16 %v1650, %v1648
    %v2175 = vpack.c.b16 %v1653, %v1651
    %v2176 = vpack.c.b16 %v1654, %v1652
    %v2177 = vpack.c.b16 %v1657, %v1655
    %v2178 = vpack.c.b16 %v1658, %v1656
    %v2179 = vpack.c.b16 %v1661, %v1659
    %v2180 = vpack.c.b16 %v1662, %v1660
    %v2181 = vpack.c.b16 %v1665, %v1663
    %v2182 = vpack.c.b16 %v1666, %v1664
    %v2183 = vpack.c.b16 %v1669, %v1667
    %v2184 = vpack.c.b16 %v1670, %v1668
    %v2185 = vpack.c.b16 %v1673, %v1671
    %v2186 = vpack.c.b16 %v1674, %v1672
    %v2187 = vpack.c.b16 %v1677, %v1675
    %v2188 = vpack.c.b16 %v1678, %v1676
    %v2189 = vpack.c.b16 %v1681, %v1679
    %v2190 = vpack.c.b16 %v1682, %v1680
    %v2191 = vpack.c.b16 %v1685, %v1683
    %v2192 = vpack.c.b16 %v1686, %v1684
    %v2193 = vpack.c.b16 %v1689, %v1687
    %v2194 = vpack.c.b16 %v1690, %v1688
    %v2195 = vpack.c.b16 %v1693, %v1691
    %v2196 = vpack.c.b16 %v1694, %v1692
    %v2197 = vpack.c.b16 %v1697, %v1695
    %v2198 = vpack.c.b16 %v1698, %v1696
    %v2199 = vpack.c.b16 %v1701, %v1699
    %v2200 = vpack.c.b16 %v1702, %v1700
    %v2201 = vpack.c.b16 %v1705, %v1703
    %v2202 = vpack.c.b16 %v1706, %v1704
    %v2203 = vpack.c.b16 %v1709, %v1707
    %v2204 = vpack.c.b16 %v1710, %v1708
    %v2205 = vpack.c.b16 %v1713, %v1711
    %v2206 = vpack.c.b16 %v1714, %v1712
    %v2207 = vpack.c.b16 %v1717, %v1715
    %v2208 = vpack.c.b16 %v1718, %v1716
    %v2209 = vpack.c.b16 %v1721, %v1719
    %v2210 = vpack.c.b16 %v1722, %v1720
    %v2211 = vpack.c.b16 %v1725, %v1723
    %v2212 = vpack.c.b16 %v1726, %v1724
    %v2213 = vpack.c.b16 %v1729, %v1727
    %v2214 = vpack.c.b16 %v1730, %v1728
    %v2215 = vpack.c.b16 %v1733, %v1731
    %v2216 = vpack.c.b16 %v1734, %v1732
    %v2217 = vpack.c.b16 %v1737, %v1735
    %v2218 = vpack.c.b16 %v1738, %v1736
    %v2219 = vpack.c.b16 %v1741, %v1739
    %v2220 = vpack.c.b16 %v1742, %v1740
    %v2221 = vpack.c.b16 %v1745, %v1743
    %v2222 = vpack.c.b16 %v1746, %v1744
    %v2223 = vpack.c.b16 %v1749, %v1747
    %v2224 = vpack.c.b16 %v1750, %v1748
    %v2225 = vpack.c.b16 %v1753, %v1751
    %v2226 = vpack.c.b16 %v1754, %v1752
    %v2227 = vpack.c.b16 %v1757, %v1755
    %v2228 = vpack.c.b16 %v1758, %v1756
    %v2229 = vpack.c.b16 %v1761, %v1759
    %v2230 = vpack.c.b16 %v1762, %v1760
    %v2231 = vpack.c.b16 %v1765, %v1763
    %v2232 = vpack.c.b16 %v1766, %v1764
    %v2233 = vpack.c.b16 %v1769, %v1767
    %v2234 = vpack.c.b16 %v1770, %v1768
    %v2235 = vpack.c.b16 %v1773, %v1771
    %v2236 = vpack.c.b16 %v1774, %v1772
    %v2237 = vpack.c.b16 %v1777, %v1775
    %v2238 = vpack.c.b16 %v1778, %v1776
    %v2239 = vpack.c.b16 %v1781, %v1779
    %v2240 = vpack.c.b16 %v1782, %v1780
    %v2241 = vpack.c.b16 %v1785, %v1783
    %v2242 = vpack.c.b16 %v1786, %v1784
    %v2243 = vpack.c.b16 %v1789, %v1787
    %v2244 = vpack.c.b16 %v1790, %v1788
    %v2245 = vpack.c.b16 %v1793, %v1791
    %v2246 = vpack.c.b16 %v1794, %v1792
    %v2247 = vpack.c.b16 %v1797, %v1795
    %v2248 = vpack.c.b16 %v1798, %v1796
    %v2249 = vpack.c.b16 %v1801, %v1799
    %v2250 = vpack.c.b16 %v1802, %v1800
    %v2251 = vpack.c.b16 %v1805, %v1803
    %v2252 = vpack.c.b16 %v1806, %v1804
    %v2253 = vpack.c.b16 %v1809, %v1807
    %v2254 = vpack.c.b16 %v1810, %v1808
    %v2255 = vpack.c.b16 %v1813, %v1811
    %v2256 = vpack.c.b16 %v1814, %v1812
    %v2257 = vpack.c.b16 %v1817, %v1815
    %v2258 = vpack.c.b16 %v1818, %v1816
    %v2259 = vpack.c.b16 %v1821, %v1819
    %v2260 = vpack.c.b16 %v1822, %v1820
    %v2261 = vpack.c.b16 %v1825, %v1823
    %v2262 = vpack.c.b16 %v1826, %v1824
    %v2263 = vpack.c.b16 %v1829, %v1827
    %v2264 = vpack.c.b16 %v1830, %v1828
    %v2265 = vpack.c.b16 %v1833, %v1831
    %v2266 = vpack.c.b16 %v1834, %v1832
    %v2267 = vpack.c.b16 %v1837, %v1835
    %v2268 = vpack.c.b16 %v1838, %v1836
    %v2269 = vpack.c.b16 %v1841, %v1839
    %v2270 = vpack.c.b16 %v1842, %v1840
    %v2271 = vpack.c.b16 %v1845, %v1843
    %v2272 = vpack.c.b16 %v1846, %v1844
    %v2273 = vpack.c.b16 %v1849, %v1847
    %v2274 = vpack.c.b16 %v1850, %v1848
    %v2275 = vpack.c.b16 %v1853, %v1851
    %v2276 = vpack.c.b16 %v1854, %v1852
    %v2277 = vpack.c.b16 %v1857, %v1855
    %v2278 = vpack.c.b16 %v1858, %v1856
    %v2279 = vpack.c.b16 %v1861, %v1859
    %v2280 = vpack.c.b16 %v1862, %v1860
    %v2281 = vpack.c.b16 %v1865, %v1863
    %v2282 = vpack.c.b16 %v1866, %v1864
    %v2283 = vpack.c.b16 %v1869, %v1867
    %v2284 = vpack.c.b16 %v1870, %v1868
    %v2285 = vpack.c.b16 %v1873, %v1871
    %v2286 = vpack.c.b16 %v1874, %v1872
    %v2287 = vpack.c.b16 %v1877, %v1875
    %v2288 = vpack.c.b16 %v1878, %v1876
    %v2289 = vpack.c.b16 %v1881, %v1879
    %v2290 = vpack.c.b16 %v1882, %v1880
    %v2291 = vpack.c.b16 %v1885, %v1883
    %v2292 = vpack.c.b16 %v1886, %v1884
    %v2293 = vpack.c.b16 %v1889, %v1887
    %v2294 = vpack.c.b16 %v1890, %v1888
    %v2295 = vpack.c.b16 %v1893, %v1891
    %v2296 = vpack.c.b16 %v1894, %v1892
    %v2297 = vpack.c.b16 %v1897, %v1895
    %v2298 = vpack.c.b16 %v1898, %v1896
    %v2299 = vpack.c.b16 %v1901, %v1899
    %v2300 = vpack.c.b16 %v1902, %v1900
    %v2301 = vpack.c.b16 %v1905, %v1903
    %v2302 = vpack.c.b16 %v1906, %v1904
    %v2303 = vpack.c.b16 %v1909, %v1907
    %v2304 = vpack.c.b16 %v1910, %v1908
    %v2305 = vpack.c.b16 %v1913, %v1911
    %v2306 = vpack.c.b16 %v1914, %v1912
    %v2307 = vpack.c.b16 %v1917, %v1915
    %v2308 = vpack.c.b16 %v1918, %v1916
    %v2309 = vpack.c.b16 %v1921, %v1919
    %v2310 = vpack.c.b16 %v1922, %v1920
    %v2311 = vpack.c.b16 %v1925, %v1923
    %v2312 = vpack.c.b16 %v1926, %v1924
    %v2313 = vpack.c.b16 %v1929, %v1927
    %v2314 = vpack.c.b16 %v1930, %v1928
    %2699 = vmatprep.subr.bf16.mxu0 %v1932
    %2700 = vmatpush1.bf16.msra.mxu0 %v1931
    %2701 = vmatprep.subr.bf16.mxu0 %v1934
    %2702 = vmatpush1.bf16.msra.mxu0 %v1933
    %2703 = vmatprep.subr.bf16.mxu0 %v1936
    %2704 = vmatpush1.bf16.msra.mxu0 %v1935
    %2705 = vmatprep.subr.bf16.mxu0 %v1938
    %2706 = vmatpush1.bf16.msra.mxu0 %v1937
    %2707 = vmatprep.subr.bf16.mxu0 %v1940
    %2708 = vmatpush1.bf16.msra.mxu0 %v1939
    %2709 = vmatprep.subr.bf16.mxu0 %v1942
    %2710 = vmatpush1.bf16.msra.mxu0 %v1941
    %2711 = vmatprep.subr.bf16.mxu0 %v1944
    %2712 = vmatpush1.bf16.msra.mxu0 %v1943
    %2713 = vmatprep.subr.bf16.mxu0 %v1946
    %2714 = vmatpush1.bf16.msra.mxu0 %v1945
    %2715 = vmatprep.subr.bf16.mxu0 %v1948
    %2716 = vmatpush1.bf16.msra.mxu0 %v1947
    %2717 = vmatprep.subr.bf16.mxu0 %v1950
    %2718 = vmatpush1.bf16.msra.mxu0 %v1949
    %2719 = vmatprep.subr.bf16.mxu0 %v1952
    %2720 = vmatpush1.bf16.msra.mxu0 %v1951
    %2721 = vmatprep.subr.bf16.mxu0 %v1954
    %2722 = vmatpush1.bf16.msra.mxu0 %v1953
    %2723 = vmatprep.subr.bf16.mxu0 %v1956
    %2724 = vmatpush1.bf16.msra.mxu0 %v1955
    %2725 = vmatprep.subr.bf16.mxu0 %v1958
    %2726 = vmatpush1.bf16.msra.mxu0 %v1957
    %2727 = vmatprep.subr.bf16.mxu0 %v1960
    %2728 = vmatpush1.bf16.msra.mxu0 %v1959
    %2729 = vmatprep.subr.bf16.mxu0 %v1962
    %2730 = vmatpush1.bf16.msra.mxu0 %v1961
    %2731 = vmatprep.mubr.bf16.mxu0 %v360
    %2732 = vmatmul.mubr.bf16.gmra.mrb[0].mxu0 %v359
    %v2733 = vpop.f32.mrb[0].mxu0
    %v2734 = vadd.f32 %v772, %v2733
    %v2735 = vpop.f32.mrb[0].mxu0
    %v2736 = vadd.f32 %v776, %v2735
    %v2737 = vpop.f32.mrb[0].mxu0
    %v2738 = vpop.f32.mrb[0].mxu0
    %2739 = vdwg.mxu0
    %2740 = vmatprep.subr.bf16.mxu0 %v1964
    %2741 = vmatpush1.bf16.msra.mxu0 %v1963
    %2742 = vmatprep.subr.bf16.mxu0 %v1966
    %2743 = vmatpush1.bf16.msra.mxu0 %v1965
    %2744 = vmatprep.subr.bf16.mxu0 %v1968
    %2745 = vmatpush1.bf16.msra.mxu0 %v1967
    %2746 = vmatprep.subr.bf16.mxu0 %v1970
    %2747 = vmatpush1.bf16.msra.mxu0 %v1969
    %2748 = vmatprep.subr.bf16.mxu0 %v1972
    %2749 = vmatpush1.bf16.msra.mxu0 %v1971
    %2750 = vmatprep.subr.bf16.mxu0 %v1974
    %2751 = vmatpush1.bf16.msra.mxu0 %v1973
    %2752 = vmatprep.subr.bf16.mxu0 %v1976
    %2753 = vmatpush1.bf16.msra.mxu0 %v1975
    %2754 = vmatprep.subr.bf16.mxu0 %v1978
    %2755 = vmatpush1.bf16.msra.mxu0 %v1977
    %2756 = vmatprep.subr.bf16.mxu0 %v1980
    %2757 = vmatpush1.bf16.msra.mxu0 %v1979
    %2758 = vmatprep.subr.bf16.mxu0 %v1982
    %2759 = vmatpush1.bf16.msra.mxu0 %v1981
    %2760 = vmatprep.subr.bf16.mxu0 %v1984
    %2761 = vmatpush1.bf16.msra.mxu0 %v1983
    %2762 = vmatprep.subr.bf16.mxu0 %v1986
    %2763 = vmatpush1.bf16.msra.mxu0 %v1985
    %2764 = vmatprep.subr.bf16.mxu0 %v1988
    %2765 = vmatpush1.bf16.msra.mxu0 %v1987
    %2766 = vmatprep.subr.bf16.mxu0 %v1990
    %2767 = vmatpush1.bf16.msra.mxu0 %v1989
    %2768 = vmatprep.subr.bf16.mxu0 %v1992
    %2769 = vmatpush1.bf16.msra.mxu0 %v1991
    %2770 = vmatprep.subr.bf16.mxu0 %v1994
    %2771 = vmatpush1.bf16.msra.mxu0 %v1993
    %2772 = vmatprep.mubr.bf16.mxu0 %v362
    %2773 = vmatmul.mubr.bf16.gmra.mrb[0].mxu0 %v361
    %v2774 = vpop.f32.mrb[0].mxu0
    %v2775 = vadd.f32 %v2734, %v2774
    %v2776 = vpop.f32.mrb[0].mxu0
    %v2777 = vadd.f32 %v2736, %v2776
    %v2778 = vpop.f32.mrb[0].mxu0
    %v2779 = vpop.f32.mrb[0].mxu0
    %2780 = vdwg.mxu0
    %2781 = vmatprep.subr.bf16.mxu0 %v1996
    %2782 = vmatpush1.bf16.msra.mxu0 %v1995
    %2783 = vmatprep.subr.bf16.mxu0 %v1998
    %2784 = vmatpush1.bf16.msra.mxu0 %v1997
    %2785 = vmatprep.subr.bf16.mxu0 %v2000
    %2786 = vmatpush1.bf16.msra.mxu0 %v1999
    %2787 = vmatprep.subr.bf16.mxu0 %v2002
    %2788 = vmatpush1.bf16.msra.mxu0 %v2001
    %2789 = vmatprep.subr.bf16.mxu0 %v2004
    %2790 = vmatpush1.bf16.msra.mxu0 %v2003
    %2791 = vmatprep.subr.bf16.mxu0 %v2006
    %2792 = vmatpush1.bf16.msra.mxu0 %v2005
    %2793 = vmatprep.subr.bf16.mxu0 %v2008
    %2794 = vmatpush1.bf16.msra.mxu0 %v2007
    %2795 = vmatprep.subr.bf16.mxu0 %v2010
    %2796 = vmatpush1.bf16.msra.mxu0 %v2009
    %2797 = vmatprep.subr.bf16.mxu0 %v2012
    %2798 = vmatpush1.bf16.msra.mxu0 %v2011
    %2799 = vmatprep.subr.bf16.mxu0 %v2014
    %2800 = vmatpush1.bf16.msra.mxu0 %v2013
    %2801 = vmatprep.subr.bf16.mxu0 %v2016
    %2802 = vmatpush1.bf16.msra.mxu0 %v2015
    %2803 = vmatprep.subr.bf16.mxu0 %v2018
    %2804 = vmatpush1.bf16.msra.mxu0 %v2017
    %2805 = vmatprep.subr.bf16.mxu0 %v2020
    %2806 = vmatpush1.bf16.msra.mxu0 %v2019
    %2807 = vmatprep.subr.bf16.mxu0 %v2022
    %2808 = vmatpush1.bf16.msra.mxu0 %v2021
    %2809 = vmatprep.subr.bf16.mxu0 %v2024
    %2810 = vmatpush1.bf16.msra.mxu0 %v2023
    %2811 = vmatprep.subr.bf16.mxu0 %v2026
    %2812 = vmatpush1.bf16.msra.mxu0 %v2025
    %2813 = vmatprep.mubr.bf16.mxu0 %v364
    %2814 = vmatmul.mubr.bf16.gmra.mrb[0].mxu0 %v363
    %v2815 = vpop.f32.mrb[0].mxu0
    %v2816 = vadd.f32 %v2775, %v2815
    %v2817 = vpop.f32.mrb[0].mxu0
    %v2818 = vadd.f32 %v2777, %v2817
    %v2819 = vpop.f32.mrb[0].mxu0
    %v2820 = vpop.f32.mrb[0].mxu0
    %2821 = vdwg.mxu0
    %2822 = vmatprep.subr.bf16.mxu0 %v2028
    %2823 = vmatpush1.bf16.msra.mxu0 %v2027
    %2824 = vmatprep.subr.bf16.mxu0 %v2030
    %2825 = vmatpush1.bf16.msra.mxu0 %v2029
    %2826 = vmatprep.subr.bf16.mxu0 %v2032
    %2827 = vmatpush1.bf16.msra.mxu0 %v2031
    %2828 = vmatprep.subr.bf16.mxu0 %v2034
    %2829 = vmatpush1.bf16.msra.mxu0 %v2033
    %2830 = vmatprep.subr.bf16.mxu0 %v2036
    %2831 = vmatpush1.bf16.msra.mxu0 %v2035
    %2832 = vmatprep.subr.bf16.mxu0 %v2038
    %2833 = vmatpush1.bf16.msra.mxu0 %v2037
    %2834 = vmatprep.subr.bf16.mxu0 %v2040
    %2835 = vmatpush1.bf16.msra.mxu0 %v2039
    %2836 = vmatprep.subr.bf16.mxu0 %v2042
    %2837 = vmatpush1.bf16.msra.mxu0 %v2041
    %2838 = vmatprep.subr.bf16.mxu0 %v2044
    %2839 = vmatpush1.bf16.msra.mxu0 %v2043
    %2840 = vmatprep.subr.bf16.mxu0 %v2046
    %2841 = vmatpush1.bf16.msra.mxu0 %v2045
    %2842 = vmatprep.subr.bf16.mxu0 %v2048
    %2843 = vmatpush1.bf16.msra.mxu0 %v2047
    %2844 = vmatprep.subr.bf16.mxu0 %v2050
    %2845 = vmatpush1.bf16.msra.mxu0 %v2049
    %2846 = vmatprep.subr.bf16.mxu0 %v2052
    %2847 = vmatpush1.bf16.msra.mxu0 %v2051
    %2848 = vmatprep.subr.bf16.mxu0 %v2054
    %2849 = vmatpush1.bf16.msra.mxu0 %v2053
    %2850 = vmatprep.subr.bf16.mxu0 %v2056
    %2851 = vmatpush1.bf16.msra.mxu0 %v2055
    %2852 = vmatprep.subr.bf16.mxu0 %v2058
    %2853 = vmatpush1.bf16.msra.mxu0 %v2057
    %2854 = vmatprep.mubr.bf16.mxu0 %v366
    %2855 = vmatmul.mubr.bf16.gmra.mrb[0].mxu0 %v365
    %v2856 = vpop.f32.mrb[0].mxu0
    %v2857 = vadd.f32 %v2816, %v2856
    %v2858 = vpop.f32.mrb[0].mxu0
    %v2859 = vadd.f32 %v2818, %v2858
    %v2860 = vpop.f32.mrb[0].mxu0
    %v2861 = vpop.f32.mrb[0].mxu0
    %2862 = vdwg.mxu0
    %2863 = vmatprep.subr.bf16.mxu0 %v2060
    %2864 = vmatpush1.bf16.msra.mxu0 %v2059
    %2865 = vmatprep.subr.bf16.mxu0 %v2062
    %2866 = vmatpush1.bf16.msra.mxu0 %v2061
    %2867 = vmatprep.subr.bf16.mxu0 %v2064
    %2868 = vmatpush1.bf16.msra.mxu0 %v2063
    %2869 = vmatprep.subr.bf16.mxu0 %v2066
    %2870 = vmatpush1.bf16.msra.mxu0 %v2065
    %2871 = vmatprep.subr.bf16.mxu0 %v2068
    %2872 = vmatpush1.bf16.msra.mxu0 %v2067
    %2873 = vmatprep.subr.bf16.mxu0 %v2070
    %2874 = vmatpush1.bf16.msra.mxu0 %v2069
    %2875 = vmatprep.subr.bf16.mxu0 %v2072
    %2876 = vmatpush1.bf16.msra.mxu0 %v2071
    %2877 = vmatprep.subr.bf16.mxu0 %v2074
    %2878 = vmatpush1.bf16.msra.mxu0 %v2073
    %2879 = vmatprep.subr.bf16.mxu0 %v2076
    %2880 = vmatpush1.bf16.msra.mxu0 %v2075
    %2881 = vmatprep.subr.bf16.mxu0 %v2078
    %2882 = vmatpush1.bf16.msra.mxu0 %v2077
    %2883 = vmatprep.subr.bf16.mxu0 %v2080
    %2884 = vmatpush1.bf16.msra.mxu0 %v2079
    %2885 = vmatprep.subr.bf16.mxu0 %v2082
    %2886 = vmatpush1.bf16.msra.mxu0 %v2081
    %2887 = vmatprep.subr.bf16.mxu0 %v2084
    %2888 = vmatpush1.bf16.msra.mxu0 %v2083
    %2889 = vmatprep.subr.bf16.mxu0 %v2086
    %2890 = vmatpush1.bf16.msra.mxu0 %v2085
    %2891 = vmatprep.subr.bf16.mxu0 %v2088
    %2892 = vmatpush1.bf16.msra.mxu0 %v2087
    %2893 = vmatprep.subr.bf16.mxu0 %v2090
    %2894 = vmatpush1.bf16.msra.mxu0 %v2089
    %2895 = vmatprep.mubr.bf16.mxu0 %v368
    %2896 = vmatmul.mubr.bf16.gmra.mrb[0].mxu0 %v367
    %v2897 = vpop.f32.mrb[0].mxu0
    %v2898 = vadd.f32 %v2857, %v2897
    %v2899 = vpop.f32.mrb[0].mxu0
    %v2900 = vadd.f32 %v2859, %v2899
    %v2901 = vpop.f32.mrb[0].mxu0
    %v2902 = vpop.f32.mrb[0].mxu0
    %2903 = vdwg.mxu0
    %2904 = vmatprep.subr.bf16.mxu0 %v2092
    %2905 = vmatpush1.bf16.msra.mxu0 %v2091
    %2906 = vmatprep.subr.bf16.mxu0 %v2094
    %2907 = vmatpush1.bf16.msra.mxu0 %v2093
    %2908 = vmatprep.subr.bf16.mxu0 %v2096
    %2909 = vmatpush1.bf16.msra.mxu0 %v2095
    %2910 = vmatprep.subr.bf16.mxu0 %v2098
    %2911 = vmatpush1.bf16.msra.mxu0 %v2097
    %2912 = vmatprep.subr.bf16.mxu0 %v2100
    %2913 = vmatpush1.bf16.msra.mxu0 %v2099
    %2914 = vmatprep.subr.bf16.mxu0 %v2102
    %2915 = vmatpush1.bf16.msra.mxu0 %v2101
    %2916 = vmatprep.subr.bf16.mxu0 %v2104
    %2917 = vmatpush1.bf16.msra.mxu0 %v2103
    %2918 = vmatprep.subr.bf16.mxu0 %v2106
    %2919 = vmatpush1.bf16.msra.mxu0 %v2105
    %2920 = vmatprep.subr.bf16.mxu0 %v2108
    %2921 = vmatpush1.bf16.msra.mxu0 %v2107
    %2922 = vmatprep.subr.bf16.mxu0 %v2110
    %2923 = vmatpush1.bf16.msra.mxu0 %v2109
    %2924 = vmatprep.subr.bf16.mxu0 %v2112
    %2925 = vmatpush1.bf16.msra.mxu0 %v2111
    %2926 = vmatprep.subr.bf16.mxu0 %v2114
    %2927 = vmatpush1.bf16.msra.mxu0 %v2113
    %2928 = vmatprep.subr.bf16.mxu0 %v2116
    %2929 = vmatpush1.bf16.msra.mxu0 %v2115
    %2930 = vmatprep.subr.bf16.mxu0 %v2118
    %2931 = vmatpush1.bf16.msra.mxu0 %v2117
    %2932 = vmatprep.subr.bf16.mxu0 %v2120
    %2933 = vmatpush1.bf16.msra.mxu0 %v2119
    %2934 = vmatprep.subr.bf16.mxu0 %v2122
    %2935 = vmatpush1.bf16.msra.mxu0 %v2121
    %2936 = vmatprep.mubr.bf16.mxu0 %v370
    %2937 = vmatmul.mubr.bf16.gmra.mrb[0].mxu0 %v369
    %v2938 = vpop.f32.mrb[0].mxu0
    %v2939 = vadd.f32 %v2898, %v2938
    %v2940 = vpop.f32.mrb[0].mxu0
    %v2941 = vadd.f32 %v2900, %v2940
    %v2942 = vpop.f32.mrb[0].mxu0
    %v2943 = vpop.f32.mrb[0].mxu0
    %2944 = vdwg.mxu0
    %2945 = vmatprep.subr.bf16.mxu0 %v2124
    %2946 = vmatpush1.bf16.msra.mxu0 %v2123
    %2947 = vmatprep.subr.bf16.mxu0 %v2126
    %2948 = vmatpush1.bf16.msra.mxu0 %v2125
    %2949 = vmatprep.subr.bf16.mxu0 %v2128
    %2950 = vmatpush1.bf16.msra.mxu0 %v2127
    %2951 = vmatprep.subr.bf16.mxu0 %v2130
    %2952 = vmatpush1.bf16.msra.mxu0 %v2129
    %2953 = vmatprep.subr.bf16.mxu0 %v2132
    %2954 = vmatpush1.bf16.msra.mxu0 %v2131
    %2955 = vmatprep.subr.bf16.mxu0 %v2134
    %2956 = vmatpush1.bf16.msra.mxu0 %v2133
    %2957 = vmatprep.subr.bf16.mxu0 %v2136
    %2958 = vmatpush1.bf16.msra.mxu0 %v2135
    %2959 = vmatprep.subr.bf16.mxu0 %v2138
    %2960 = vmatpush1.bf16.msra.mxu0 %v2137
    %2961 = vmatprep.subr.bf16.mxu0 %v2140
    %2962 = vmatpush1.bf16.msra.mxu0 %v2139
    %2963 = vmatprep.subr.bf16.mxu0 %v2142
    %2964 = vmatpush1.bf16.msra.mxu0 %v2141
    %2965 = vmatprep.subr.bf16.mxu0 %v2144
    %2966 = vmatpush1.bf16.msra.mxu0 %v2143
    %2967 = vmatprep.subr.bf16.mxu0 %v2146
    %2968 = vmatpush1.bf16.msra.mxu0 %v2145
    %2969 = vmatprep.subr.bf16.mxu0 %v2148
    %2970 = vmatpush1.bf16.msra.mxu0 %v2147
    %2971 = vmatprep.subr.bf16.mxu0 %v2150
    %2972 = vmatpush1.bf16.msra.mxu0 %v2149
    %2973 = vmatprep.subr.bf16.mxu0 %v2152
    %2974 = vmatpush1.bf16.msra.mxu0 %v2151
    %2975 = vmatprep.subr.bf16.mxu0 %v2154
    %2976 = vmatpush1.bf16.msra.mxu0 %v2153
    %2977 = vmatprep.mubr.bf16.mxu0 %v372
    %2978 = vmatmul.mubr.bf16.gmra.mrb[0].mxu0 %v371
    %v2979 = vpop.f32.mrb[0].mxu0
    %v2980 = vadd.f32 %v2939, %v2979
    %v2981 = vpop.f32.mrb[0].mxu0
    %v2982 = vadd.f32 %v2941, %v2981
    %v2983 = vpop.f32.mrb[0].mxu0
    %v2984 = vpop.f32.mrb[0].mxu0
    %2985 = vdwg.mxu0
    %2986 = vmatprep.subr.bf16.mxu0 %v2156
    %2987 = vmatpush1.bf16.msra.mxu0 %v2155
    %2988 = vmatprep.subr.bf16.mxu0 %v2158
    %2989 = vmatpush1.bf16.msra.mxu0 %v2157
    %2990 = vmatprep.subr.bf16.mxu0 %v2160
    %2991 = vmatpush1.bf16.msra.mxu0 %v2159
    %2992 = vmatprep.subr.bf16.mxu0 %v2162
    %2993 = vmatpush1.bf16.msra.mxu0 %v2161
    %2994 = vmatprep.subr.bf16.mxu0 %v2164
    %2995 = vmatpush1.bf16.msra.mxu0 %v2163
    %2996 = vmatprep.subr.bf16.mxu0 %v2166
    %2997 = vmatpush1.bf16.msra.mxu0 %v2165
    %2998 = vmatprep.subr.bf16.mxu0 %v2168
    %2999 = vmatpush1.bf16.msra.mxu0 %v2167
    %3000 = vmatprep.subr.bf16.mxu0 %v2170
    %3001 = vmatpush1.bf16.msra.mxu0 %v2169
    %3002 = vmatprep.subr.bf16.mxu0 %v2172
    %3003 = vmatpush1.bf16.msra.mxu0 %v2171
    %3004 = vmatprep.subr.bf16.mxu0 %v2174
    %3005 = vmatpush1.bf16.msra.mxu0 %v2173
    %3006 = vmatprep.subr.bf16.mxu0 %v2176
    %3007 = vmatpush1.bf16.msra.mxu0 %v2175
    %3008 = vmatprep.subr.bf16.mxu0 %v2178
    %3009 = vmatpush1.bf16.msra.mxu0 %v2177
    %3010 = vmatprep.subr.bf16.mxu0 %v2180
    %3011 = vmatpush1.bf16.msra.mxu0 %v2179
    %3012 = vmatprep.subr.bf16.mxu0 %v2182
    %3013 = vmatpush1.bf16.msra.mxu0 %v2181
    %3014 = vmatprep.subr.bf16.mxu0 %v2184
    %3015 = vmatpush1.bf16.msra.mxu0 %v2183
    %3016 = vmatprep.subr.bf16.mxu0 %v2186
    %3017 = vmatpush1.bf16.msra.mxu0 %v2185
    %3018 = vmatprep.mubr.bf16.mxu0 %v374
    %3019 = vmatmul.mubr.bf16.gmra.mrb[0].mxu0 %v373
    %v3020 = vpop.f32.mrb[0].mxu0
    %v3021 = vadd.f32 %v2980, %v3020
    %v3022 = vpop.f32.mrb[0].mxu0
    %v3023 = vadd.f32 %v2982, %v3022
    %v3024 = vpop.f32.mrb[0].mxu0
    %v3025 = vpop.f32.mrb[0].mxu0
    %3026 = vdwg.mxu0
    %3027 = vmatprep.subr.bf16.mxu0 %v2188
    %3028 = vmatpush1.bf16.msra.mxu0 %v2187
    %3029 = vmatprep.subr.bf16.mxu0 %v2190
    %3030 = vmatpush1.bf16.msra.mxu0 %v2189
    %3031 = vmatprep.subr.bf16.mxu0 %v2192
    %3032 = vmatpush1.bf16.msra.mxu0 %v2191
    %3033 = vmatprep.subr.bf16.mxu0 %v2194
    %3034 = vmatpush1.bf16.msra.mxu0 %v2193
    %3035 = vmatprep.subr.bf16.mxu0 %v2196
    %3036 = vmatpush1.bf16.msra.mxu0 %v2195
    %3037 = vmatprep.subr.bf16.mxu0 %v2198
    %3038 = vmatpush1.bf16.msra.mxu0 %v2197
    %3039 = vmatprep.subr.bf16.mxu0 %v2200
    %3040 = vmatpush1.bf16.msra.mxu0 %v2199
    %3041 = vmatprep.subr.bf16.mxu0 %v2202
    %3042 = vmatpush1.bf16.msra.mxu0 %v2201
    %3043 = vmatprep.subr.bf16.mxu0 %v2204
    %3044 = vmatpush1.bf16.msra.mxu0 %v2203
    %3045 = vmatprep.subr.bf16.mxu0 %v2206
    %3046 = vmatpush1.bf16.msra.mxu0 %v2205
    %3047 = vmatprep.subr.bf16.mxu0 %v2208
    %3048 = vmatpush1.bf16.msra.mxu0 %v2207
    %3049 = vmatprep.subr.bf16.mxu0 %v2210
    %3050 = vmatpush1.bf16.msra.mxu0 %v2209
    %3051 = vmatprep.subr.bf16.mxu0 %v2212
    %3052 = vmatpush1.bf16.msra.mxu0 %v2211
    %3053 = vmatprep.subr.bf16.mxu0 %v2214
    %3054 = vmatpush1.bf16.msra.mxu0 %v2213
    %3055 = vmatprep.subr.bf16.mxu0 %v2216
    %3056 = vmatpush1.bf16.msra.mxu0 %v2215
    %3057 = vmatprep.subr.bf16.mxu0 %v2218
    %3058 = vmatpush1.bf16.msra.mxu0 %v2217
    %3059 = vmatprep.mubr.bf16.mxu0 %v376
    %3060 = vmatmul.mubr.bf16.gmra.mrb[0].mxu0 %v375
    %v3061 = vpop.f32.mrb[0].mxu0
    %v3062 = vadd.f32 %v3021, %v3061
    %v3063 = vpop.f32.mrb[0].mxu0
    %v3064 = vadd.f32 %v3023, %v3063
    %v3065 = vpop.f32.mrb[0].mxu0
    %v3066 = vpop.f32.mrb[0].mxu0
    %3067 = vdwg.mxu0
    %3068 = vmatprep.subr.bf16.mxu0 %v2220
    %3069 = vmatpush1.bf16.msra.mxu0 %v2219
    %3070 = vmatprep.subr.bf16.mxu0 %v2222
    %3071 = vmatpush1.bf16.msra.mxu0 %v2221
    %3072 = vmatprep.subr.bf16.mxu0 %v2224
    %3073 = vmatpush1.bf16.msra.mxu0 %v2223
    %3074 = vmatprep.subr.bf16.mxu0 %v2226
    %3075 = vmatpush1.bf16.msra.mxu0 %v2225
    %3076 = vmatprep.subr.bf16.mxu0 %v2228
    %3077 = vmatpush1.bf16.msra.mxu0 %v2227
    %3078 = vmatprep.subr.bf16.mxu0 %v2230
    %3079 = vmatpush1.bf16.msra.mxu0 %v2229
    %3080 = vmatprep.subr.bf16.mxu0 %v2232
    %3081 = vmatpush1.bf16.msra.mxu0 %v2231
    %3082 = vmatprep.subr.bf16.mxu0 %v2234
    %3083 = vmatpush1.bf16.msra.mxu0 %v2233
    %3084 = vmatprep.subr.bf16.mxu0 %v2236
    %3085 = vmatpush1.bf16.msra.mxu0 %v2235
    %3086 = vmatprep.subr.bf16.mxu0 %v2238
    %3087 = vmatpush1.bf16.msra.mxu0 %v2237
    %3088 = vmatprep.subr.bf16.mxu0 %v2240
    %3089 = vmatpush1.bf16.msra.mxu0 %v2239
    %3090 = vmatprep.subr.bf16.mxu0 %v2242
    %3091 = vmatpush1.bf16.msra.mxu0 %v2241
    %3092 = vmatprep.subr.bf16.mxu0 %v2244
    %3093 = vmatpush1.bf16.msra.mxu0 %v2243
    %3094 = vmatprep.subr.bf16.mxu0 %v2246
    %3095 = vmatpush1.bf16.msra.mxu0 %v2245
    %3096 = vmatprep.subr.bf16.mxu0 %v2248
    %3097 = vmatpush1.bf16.msra.mxu0 %v2247
    %3098 = vmatprep.subr.bf16.mxu0 %v2250
    %3099 = vmatpush1.bf16.msra.mxu0 %v2249
    %3100 = vmatprep.mubr.bf16.mxu0 %v378
    %3101 = vmatmul.mubr.bf16.gmra.mrb[0].mxu0 %v377
    %v3102 = vpop.f32.mrb[0].mxu0
    %v3103 = vadd.f32 %v3062, %v3102
    %v3104 = vpop.f32.mrb[0].mxu0
    %v3105 = vadd.f32 %v3064, %v3104
    %v3106 = vpop.f32.mrb[0].mxu0
    %v3107 = vpop.f32.mrb[0].mxu0
    %3108 = vdwg.mxu0
    %3109 = vmatprep.subr.bf16.mxu0 %v2252
    %3110 = vmatpush1.bf16.msra.mxu0 %v2251
    %3111 = vmatprep.subr.bf16.mxu0 %v2254
    %3112 = vmatpush1.bf16.msra.mxu0 %v2253
    %3113 = vmatprep.subr.bf16.mxu0 %v2256
    %3114 = vmatpush1.bf16.msra.mxu0 %v2255
    %3115 = vmatprep.subr.bf16.mxu0 %v2258
    %3116 = vmatpush1.bf16.msra.mxu0 %v2257
    %3117 = vmatprep.subr.bf16.mxu0 %v2260
    %3118 = vmatpush1.bf16.msra.mxu0 %v2259
    %3119 = vmatprep.subr.bf16.mxu0 %v2262
    %3120 = vmatpush1.bf16.msra.mxu0 %v2261
    %3121 = vmatprep.subr.bf16.mxu0 %v2264
    %3122 = vmatpush1.bf16.msra.mxu0 %v2263
    %3123 = vmatprep.subr.bf16.mxu0 %v2266
    %3124 = vmatpush1.bf16.msra.mxu0 %v2265
    %3125 = vmatprep.subr.bf16.mxu0 %v2268
    %3126 = vmatpush1.bf16.msra.mxu0 %v2267
    %3127 = vmatprep.subr.bf16.mxu0 %v2270
    %3128 = vmatpush1.bf16.msra.mxu0 %v2269
    %3129 = vmatprep.subr.bf16.mxu0 %v2272
    %3130 = vmatpush1.bf16.msra.mxu0 %v2271
    %3131 = vmatprep.subr.bf16.mxu0 %v2274
    %3132 = vmatpush1.bf16.msra.mxu0 %v2273
    %3133 = vmatprep.subr.bf16.mxu0 %v2276
    %3134 = vmatpush1.bf16.msra.mxu0 %v2275
    %3135 = vmatprep.subr.bf16.mxu0 %v2278
    %3136 = vmatpush1.bf16.msra.mxu0 %v2277
    %3137 = vmatprep.subr.bf16.mxu0 %v2280
    %3138 = vmatpush1.bf16.msra.mxu0 %v2279
    %3139 = vmatprep.subr.bf16.mxu0 %v2282
    %3140 = vmatpush1.bf16.msra.mxu0 %v2281
    %3141 = vmatprep.mubr.bf16.mxu0 %v380
    %3142 = vmatmul.mubr.bf16.gmra.mrb[0].mxu0 %v379
    %v3143 = vpop.f32.mrb[0].mxu0
    %v3144 = vadd.f32 %v3103, %v3143
    %v3145 = vpop.f32.mrb[0].mxu0
    %v3146 = vadd.f32 %v3105, %v3145
    %v3147 = vpop.f32.mrb[0].mxu0
    %v3148 = vpop.f32.mrb[0].mxu0
    %3149 = vdwg.mxu0
    %3150 = vmatprep.subr.bf16.mxu0 %v2284
    %3151 = vmatpush1.bf16.msra.mxu0 %v2283
    %3152 = vmatprep.subr.bf16.mxu0 %v2286
    %3153 = vmatpush1.bf16.msra.mxu0 %v2285
    %3154 = vmatprep.subr.bf16.mxu0 %v2288
    %3155 = vmatpush1.bf16.msra.mxu0 %v2287
    %3156 = vmatprep.subr.bf16.mxu0 %v2290
    %3157 = vmatpush1.bf16.msra.mxu0 %v2289
    %3158 = vmatprep.subr.bf16.mxu0 %v2292
    %3159 = vmatpush1.bf16.msra.mxu0 %v2291
    %3160 = vmatprep.subr.bf16.mxu0 %v2294
    %3161 = vmatpush1.bf16.msra.mxu0 %v2293
    %3162 = vmatprep.subr.bf16.mxu0 %v2296
    %3163 = vmatpush1.bf16.msra.mxu0 %v2295
    %3164 = vmatprep.subr.bf16.mxu0 %v2298
    %3165 = vmatpush1.bf16.msra.mxu0 %v2297
    %3166 = vmatprep.subr.bf16.mxu0 %v2300
    %3167 = vmatpush1.bf16.msra.mxu0 %v2299
    %3168 = vmatprep.subr.bf16.mxu0 %v2302
    %3169 = vmatpush1.bf16.msra.mxu0 %v2301
    %3170 = vmatprep.subr.bf16.mxu0 %v2304
    %3171 = vmatpush1.bf16.msra.mxu0 %v2303
    %3172 = vmatprep.subr.bf16.mxu0 %v2306
    %3173 = vmatpush1.bf16.msra.mxu0 %v2305
    %3174 = vmatprep.subr.bf16.mxu0 %v2308
    %3175 = vmatpush1.bf16.msra.mxu0 %v2307
    %3176 = vmatprep.subr.bf16.mxu0 %v2310
    %3177 = vmatpush1.bf16.msra.mxu0 %v2309
    %3178 = vmatprep.subr.bf16.mxu0 %v2312
    %3179 = vmatpush1.bf16.msra.mxu0 %v2311
    %3180 = vmatprep.subr.bf16.mxu0 %v2314
    %3181 = vmatpush1.bf16.msra.mxu0 %v2313
    %3182 = vmatprep.mubr.bf16.mxu0 %v382
    %3183 = vmatmul.mubr.bf16.gmra.mrb[0].mxu0 %v381
    %v3184 = vpop.f32.mrb[0].mxu0
    %v3185 = vadd.f32 %v3144, %v3184
    %v3186 = vpop.f32.mrb[0].mxu0
    %v3187 = vadd.f32 %v3146, %v3186
    %v3188 = vpop.f32.mrb[0].mxu0
    %v3189 = vpop.f32.mrb[0].mxu0
    %3190 = vdwg.mxu0
    %v3191 = vmax.f32 %v3185, 0.0
    %v3192 = vmax.f32 %v3187, 0.0
    %v3193 = vpack.c.bf16 %v3191, %v3191
    %v3194 = vpack.c.bf16 %v3192, %v3192
    %v3195 = vld [vmem:[#allocation6] sm:$0xff]
    %v3196 = vld [vmem:[#allocation6 + $0x8] sm:$0xff]
    %v3197 = vld [vmem:[#allocation6 + $0x10] sm:$0xff]
    %v3198 = vld [vmem:[#allocation6 + $0x18] sm:$0xff]
    %v3199 = vld [vmem:[#allocation6 + $0x20] sm:$0xff]
    %v3200 = vld [vmem:[#allocation6 + $0x28] sm:$0xff]
    %v3201 = vld [vmem:[#allocation6 + $0x30] sm:$0xff]
    %v3202 = vld [vmem:[#allocation6 + $0x38] sm:$0xff]
    %v3203 = vld [vmem:[#allocation6 + $0x40] sm:$0xff]
    %v3204 = vld [vmem:[#allocation6 + $0x48] sm:$0xff]
    %v3205 = vld [vmem:[#allocation6 + $0x50] sm:$0xff]
    %v3206 = vld [vmem:[#allocation6 + $0x58] sm:$0xff]
    %v3207 = vld [vmem:[#allocation6 + $0x60] sm:$0xff]
    %v3208 = vld [vmem:[#allocation6 + $0x68] sm:$0xff]
    %v3209 = vld [vmem:[#allocation6 + $0x70] sm:$0xff]
    %v3210 = vld [vmem:[#allocation6 + $0x78] sm:$0xff]
    %v3211 = vld [vmem:[#allocation6 + $0x80] sm:$0xff]
    %v3212 = vld [vmem:[#allocation6 + $0x88] sm:$0xff]
    %v3213 = vld [vmem:[#allocation6 + $0x90] sm:$0xff]
    %v3214 = vld [vmem:[#allocation6 + $0x98] sm:$0xff]
    %v3215 = vld [vmem:[#allocation6 + $0xa0] sm:$0xff]
    %v3216 = vld [vmem:[#allocation6 + $0xa8] sm:$0xff]
    %v3217 = vld [vmem:[#allocation6 + $0xb0] sm:$0xff]
    %v3218 = vld [vmem:[#allocation6 + $0xb8] sm:$0xff]
    %v3219 = vld [vmem:[#allocation6 + $0xc0] sm:$0xff]
    %v3220 = vld [vmem:[#allocation6 + $0xc8] sm:$0xff]
    %v3221 = vld [vmem:[#allocation6 + $0xd0] sm:$0xff]
    %v3222 = vld [vmem:[#allocation6 + $0xd8] sm:$0xff]
    %v3223 = vld [vmem:[#allocation6 + $0xe0] sm:$0xff]
    %v3224 = vld [vmem:[#allocation6 + $0xe8] sm:$0xff]
    %v3225 = vld [vmem:[#allocation6 + $0xf0] sm:$0xff]
    %v3226 = vld [vmem:[#allocation6 + $0xf8] sm:$0xff]
    %v3227 = vld [vmem:[#allocation7] sm:$0x3]
    %v3229 = vlaneseq
    %v3230 = vshrl.u32 %v3229, 7
    %v3231 = vsub.s32 0, %v3230
    %v3232 = vrot.slane %v3227, %v3231
    %v3233 = vlaneseq
    %v3234 = vshrl.u32 %v3233, 7
    %v3235 = vsub.s32 1, %v3234
    %v3236 = vrot.slane %v3227, %v3235
    %v3271 = vunpack.c.l.b16 %v3195
    %v3272 = vunpack.c.h.b16 %v3195
    %v3273 = vunpack.c.l.b16 %v3196
    %v3274 = vunpack.c.h.b16 %v3196
    %v3275 = vunpack.c.l.b16 %v3197
    %v3276 = vunpack.c.h.b16 %v3197
    %v3277 = vunpack.c.l.b16 %v3198
    %v3278 = vunpack.c.h.b16 %v3198
    %v3279 = vunpack.c.l.b16 %v3199
    %v3280 = vunpack.c.h.b16 %v3199
    %v3281 = vunpack.c.l.b16 %v3200
    %v3282 = vunpack.c.h.b16 %v3200
    %v3283 = vunpack.c.l.b16 %v3201
    %v3284 = vunpack.c.h.b16 %v3201
    %v3285 = vunpack.c.l.b16 %v3202
    %v3286 = vunpack.c.h.b16 %v3202
    %v3287 = vunpack.c.l.b16 %v3203
    %v3288 = vunpack.c.h.b16 %v3203
    %v3289 = vunpack.c.l.b16 %v3204
    %v3290 = vunpack.c.h.b16 %v3204
    %v3291 = vunpack.c.l.b16 %v3205
    %v3292 = vunpack.c.h.b16 %v3205
    %v3293 = vunpack.c.l.b16 %v3206
    %v3294 = vunpack.c.h.b16 %v3206
    %v3295 = vunpack.c.l.b16 %v3207
    %v3296 = vunpack.c.h.b16 %v3207
    %v3297 = vunpack.c.l.b16 %v3208
    %v3298 = vunpack.c.h.b16 %v3208
    %v3299 = vunpack.c.l.b16 %v3209
    %v3300 = vunpack.c.h.b16 %v3209
    %v3301 = vunpack.c.l.b16 %v3210
    %v3302 = vunpack.c.h.b16 %v3210
    %v3303 = vunpack.c.l.b16 %v3211
    %v3304 = vunpack.c.h.b16 %v3211
    %v3305 = vunpack.c.l.b16 %v3212
    %v3306 = vunpack.c.h.b16 %v3212
    %v3307 = vunpack.c.l.b16 %v3213
    %v3308 = vunpack.c.h.b16 %v3213
    %v3309 = vunpack.c.l.b16 %v3214
    %v3310 = vunpack.c.h.b16 %v3214
    %v3311 = vunpack.c.l.b16 %v3215
    %v3312 = vunpack.c.h.b16 %v3215
    %v3313 = vunpack.c.l.b16 %v3216
    %v3314 = vunpack.c.h.b16 %v3216
    %v3315 = vunpack.c.l.b16 %v3217
    %v3316 = vunpack.c.h.b16 %v3217
    %v3317 = vunpack.c.l.b16 %v3218
    %v3318 = vunpack.c.h.b16 %v3218
    %v3319 = vunpack.c.l.b16 %v3219
    %v3320 = vunpack.c.h.b16 %v3219
    %v3321 = vunpack.c.l.b16 %v3220
    %v3322 = vunpack.c.h.b16 %v3220
    %v3323 = vunpack.c.l.b16 %v3221
    %v3324 = vunpack.c.h.b16 %v3221
    %v3325 = vunpack.c.l.b16 %v3222
    %v3326 = vunpack.c.h.b16 %v3222
    %v3327 = vunpack.c.l.b16 %v3223
    %v3328 = vunpack.c.h.b16 %v3223
    %v3329 = vunpack.c.l.b16 %v3224
    %v3330 = vunpack.c.h.b16 %v3224
    %v3331 = vunpack.c.l.b16 %v3225
    %v3332 = vunpack.c.h.b16 %v3225
    %v3333 = vunpack.c.l.b16 %v3226
    %v3334 = vunpack.c.h.b16 %v3226
    %v3335 = vpack.c.b16 %v3273, %v3271
    %v3336 = vpack.c.b16 %v3274, %v3272
    %v3337 = vpack.c.b16 %v3277, %v3275
    %v3338 = vpack.c.b16 %v3278, %v3276
    %v3339 = vpack.c.b16 %v3281, %v3279
    %v3340 = vpack.c.b16 %v3282, %v3280
    %v3341 = vpack.c.b16 %v3285, %v3283
    %v3342 = vpack.c.b16 %v3286, %v3284
    %v3343 = vpack.c.b16 %v3289, %v3287
    %v3344 = vpack.c.b16 %v3290, %v3288
    %v3345 = vpack.c.b16 %v3293, %v3291
    %v3346 = vpack.c.b16 %v3294, %v3292
    %v3347 = vpack.c.b16 %v3297, %v3295
    %v3348 = vpack.c.b16 %v3298, %v3296
    %v3349 = vpack.c.b16 %v3301, %v3299
    %v3350 = vpack.c.b16 %v3302, %v3300
    %v3351 = vpack.c.b16 %v3305, %v3303
    %v3352 = vpack.c.b16 %v3306, %v3304
    %v3353 = vpack.c.b16 %v3309, %v3307
    %v3354 = vpack.c.b16 %v3310, %v3308
    %v3355 = vpack.c.b16 %v3313, %v3311
    %v3356 = vpack.c.b16 %v3314, %v3312
    %v3357 = vpack.c.b16 %v3317, %v3315
    %v3358 = vpack.c.b16 %v3318, %v3316
    %v3359 = vpack.c.b16 %v3321, %v3319
    %v3360 = vpack.c.b16 %v3322, %v3320
    %v3361 = vpack.c.b16 %v3325, %v3323
    %v3362 = vpack.c.b16 %v3326, %v3324
    %v3363 = vpack.c.b16 %v3329, %v3327
    %v3364 = vpack.c.b16 %v3330, %v3328
    %v3365 = vpack.c.b16 %v3333, %v3331
    %v3366 = vpack.c.b16 %v3334, %v3332
    %3399 = vmatprep.subr.bf16.mxu0 %v3336
    %3400 = vmatpush1.bf16.msra.mxu0 %v3335
    %3401 = vmatprep.subr.bf16.mxu0 %v3338
    %3402 = vmatpush1.bf16.msra.mxu0 %v3337
    %3403 = vmatprep.subr.bf16.mxu0 %v3340
    %3404 = vmatpush1.bf16.msra.mxu0 %v3339
    %3405 = vmatprep.subr.bf16.mxu0 %v3342
    %3406 = vmatpush1.bf16.msra.mxu0 %v3341
    %3407 = vmatprep.subr.bf16.mxu0 %v3344
    %3408 = vmatpush1.bf16.msra.mxu0 %v3343
    %3409 = vmatprep.subr.bf16.mxu0 %v3346
    %3410 = vmatpush1.bf16.msra.mxu0 %v3345
    %3411 = vmatprep.subr.bf16.mxu0 %v3348
    %3412 = vmatpush1.bf16.msra.mxu0 %v3347
    %3413 = vmatprep.subr.bf16.mxu0 %v3350
    %3414 = vmatpush1.bf16.msra.mxu0 %v3349
    %3415 = vmatprep.subr.bf16.mxu0 %v3352
    %3416 = vmatpush1.bf16.msra.mxu0 %v3351
    %3417 = vmatprep.subr.bf16.mxu0 %v3354
    %3418 = vmatpush1.bf16.msra.mxu0 %v3353
    %3419 = vmatprep.subr.bf16.mxu0 %v3356
    %3420 = vmatpush1.bf16.msra.mxu0 %v3355
    %3421 = vmatprep.subr.bf16.mxu0 %v3358
    %3422 = vmatpush1.bf16.msra.mxu0 %v3357
    %3423 = vmatprep.subr.bf16.mxu0 %v3360
    %3424 = vmatpush1.bf16.msra.mxu0 %v3359
    %3425 = vmatprep.subr.bf16.mxu0 %v3362
    %3426 = vmatpush1.bf16.msra.mxu0 %v3361
    %3427 = vmatprep.subr.bf16.mxu0 %v3364
    %3428 = vmatpush1.bf16.msra.mxu0 %v3363
    %3429 = vmatprep.subr.bf16.mxu0 %v3366
    %3430 = vmatpush1.bf16.msra.mxu0 %v3365
    %3431 = vmatprep.mubr.bf16.mxu0 %v3194
    %3432 = vmatmul.mubr.bf16.gmra.mrb[0].mxu0 %v3193
    %v3433 = vpop.f32.mrb[0].mxu0
    %v3434 = vadd.f32 %v3232, %v3433
    %v3435 = vpop.f32.mrb[0].mxu0
    %v3436 = vadd.f32 %v3236, %v3435
    %v3437 = vpop.f32.mrb[0].mxu0
    %v3438 = vpop.f32.mrb[0].mxu0
    %3439 = vdwg.mxu0
    %v3440 = vmax.f32 %v3434, 0.0
    %v3441 = vmax.f32 %v3436, 0.0
    %v3444 = vcombine.low %v3440, %v3441
    %v3445 = vcombine.high %v3440, %v3441
    %v3447 = vunpack.c.l.s4 1983009808
    %v3448 = vunpack.c.0.s8 %v3447
    %v3449 = vlaneseq
    %v3450 = vshrl.u32 %v3449, 7
    %v3451 = vsub.s32 %v3448, %v3450
    %v3452 = vrot.slane %v3444, %v3451
    %v3454 = vunpack.c.l.s4 1983009808
    %v3455 = vunpack.c.0.s8 %v3454
    %v3456 = vlaneseq
    %v3457 = vshrl.u32 %v3456, 7
    %v3458 = vsub.s32 %v3455, %v3457
    %v3459 = vrot.slane %v3445, %v3458
    %v3460 = vcombine.high %v3452, %v3452
    %v3461 = vcombine.high %v3459, %v3459
    %3466 = vst [vmem:[#allocation9] sm:$0xf] %v3452
    %3467 = vst [vmem:[#allocation9 + $0x4] sm:$0xf] %v3460
    %3468 = vst [vmem:[#allocation9 + $0x8] sm:$0xf] %v3459
    %3469 = vst [vmem:[#allocation9 + $0xc] sm:$0xf] %v3461
    // Predicated region
    $region38: #{mlp_forward.1} parent=1 // pred_check
      _
    $region39: #{mlp_forward.1} parent=1 // pred_check_branch
      %3471 = sbr.rel (0) target = $region41
    $region40: #{mlp_forward.1} parent=1 // pred_region
      // Predicated region
      $region42: #{mlp_forward.1} parent=40 // pred_check
        _
      $region43: #{mlp_forward.1} parent=40 // pred_check_branch
        %3473 = sbr.rel (0) target = $region45
      $region44: #{mlp_forward.1} parent=40 // pred_region
        // Predicated region
        $region46: #{mlp_forward.1} parent=44 // pred_check
          _
        $region47: #{mlp_forward.1} parent=44 // pred_check_branch
          %3475 = sbr.rel target = $region49
        $region48: #{mlp_forward.1} parent=44 // pred_region
          // Predicated region
          $region61: #{mlp_forward.1} parent=48 // pred_check
            _
          $region62: #{mlp_forward.1} parent=48 // pred_check_branch
            %3490 = sbr.rel (0) target = $region64
          $region63: #{mlp_forward.1} parent=48 // pred_region
            loop: start=0, step=1, limit=1
            $region65: #{mlp_forward.1} parent=63 // loop_pre_header
              _
            $region66: #{mlp_forward.1} parent=63 // loop_header
              %s3493 = sphi 0, %s3497
              %p3494 = scmp.ge.s32.totalorder %s3493, 1
              %s3498 = sphi [#allocation9], [#allocation9]
              %s3499 = sphi %s5, %s5
            $region67: #{mlp_forward.1} parent=63 // loop_header_branch
              %3496 = sbr.rel (%p3494) target = $region71
            $region68: #{mlp_forward.1} parent=63 // loop_body
              %v3500 = vld [vmem:[%s3498] sm:$0xf]
              %3501 = vst [vmem:[%s3499] sm:$0xf] %v3500
            $region69: #{mlp_forward.1} parent=63 // loop_footer
              %s3497 = sadd.s32 1, %s3493
            $region70: #{mlp_forward.1} parent=63 // loop_footer_branch
              %3492 = sbr.rel target = $region66
            $region71: #{mlp_forward.1} parent=63 // loop_exit
              _
          $region64: #{mlp_forward.1} parent=48 // pred_fallthru
            _
        $region49: #{mlp_forward.1} parent=44 // pred_fallthru
          _
        // Predicated region
        $region50: #{mlp_forward.1} parent=44 // pred_check
          _
        $region51: #{mlp_forward.1} parent=44 // pred_check_branch
          %3477 = sbr.rel (0) target = $region53
        $region52: #{mlp_forward.1} parent=44 // pred_region
          loop: start=0, step=1, limit=1
          $region54: #{mlp_forward.1} parent=52 // loop_pre_header
            _
          $region55: #{mlp_forward.1} parent=52 // loop_header
            %s3480 = sphi 0, %s3484
            %p3481 = scmp.ge.s32.totalorder %s3480, 1
            %s3485 = sphi [#allocation9], [#allocation9]
            %s3486 = sphi %s5, %s5
          $region56: #{mlp_forward.1} parent=52 // loop_header_branch
            %3483 = sbr.rel (%p3481) target = $region60
          $region57: #{mlp_forward.1} parent=52 // loop_body
            %v3487 = vld [vmem:[%s3485] sm:$0xf]
            %3488 = vst [vmem:[%s3486] sm:$0xf] %v3487
          $region58: #{mlp_forward.1} parent=52 // loop_footer
            %s3484 = sadd.s32 1, %s3480
          $region59: #{mlp_forward.1} parent=52 // loop_footer_branch
            %3479 = sbr.rel target = $region55
          $region60: #{mlp_forward.1} parent=52 // loop_exit
            _
        $region53: #{mlp_forward.1} parent=44 // pred_fallthru
          _
      $region45: #{mlp_forward.1} parent=40 // pred_fallthru
        _
      %3502 = vnop
    $region41: #{mlp_forward.1} parent=1 // pred_fallthru
      _
    // Predicated region
    $region72: #{mlp_forward.1} parent=1 // pred_check
      _
    $region73: #{mlp_forward.1} parent=1 // pred_check_branch
      %3504 = sbr.rel (0) target = $region75
    $region74: #{mlp_forward.1} parent=1 // pred_region
      _
    $region75: #{mlp_forward.1} parent=1 // pred_fallthru
      _
    %3505 = vsyncpa [#allocation3], 1
    %3506 = vsyncpa [#allocation5], 1
    %3507 = vsyncpa [#allocation8], 1

</llo_original>
